<compile_context>
chip_gen: v6e
topology: v6e:2x2x1
jax: 0.10.0
libtpu: 0.0.40
codegen_flags: <defaults>
</compile_context>

<pallas_src>
import functools

import jax
import jax.numpy as jnp
from jax.experimental import pallas as pl
from jax.experimental.pallas import tpu as pltpu


def _leaky_relu_02(x):
    # nn.LeakyReLU(0.2): x if x > 0 else 0.2 * x
    return jnp.where(x > 0, x, 0.2 * x)


def _round_up(x, m):
    return (x + m - 1) // m * m


def _pad2(a, rows, cols):
    r, c = a.shape
    return jnp.pad(a, ((0, rows - r), (0, cols - c)))


@functools.lru_cache(maxsize=1)
def _vmem_cap_bytes():
    """3/4 of this generation's per-core VMEM (48 MiB fallback, v7x-safe)."""
    cap = 64 << 20
    try:
        info = pltpu.get_tpu_info()
        cap = int(getattr(info, "vmem_capacity_bytes", cap) or cap)
    except Exception:
        pass
    return (cap * 3) // 4


def _const_spec(shape):
    """Full-extent block, constant index_map: fetched once, VMEM-resident.

    Single-buffered (pl.Buffered(1)) — re-fetch never happens, so a second
    buffer would only waste VMEM residency.
    """
    try:
        return pl.BlockSpec(shape, lambda i: (0, 0), pipeline_mode=pl.Buffered(1))
    except TypeError:  # older BlockSpec signature without pipeline_mode
        return pl.BlockSpec(shape, lambda i: (0, 0))


def ae_decoder_kernel(z_ref,
                      w1_ref, b1_ref,
                      w2_ref, b2_ref,
                      w3_ref, b3_ref,
                      w4_ref, b4_ref,
                      out_ref):
    # Compute dtype follows the (pre-cast) weight dtype.  f32 weights use
    # HIGHEST precision (matches the f32 reference); bf16 weights do a single
    # native MXU pass with f32 accumulation.
    cd = w1_ref.dtype
    prec = jax.lax.Precision.HIGHEST if cd == jnp.float32 else None

    def layer(x, w_ref, b_ref):
        return jnp.dot(x.astype(cd), w_ref[...],
                       preferred_element_type=jnp.float32,
                       precision=prec) + b_ref[...]

    h = _leaky_relu_02(layer(z_ref[...], w1_ref, b1_ref))
    h = _leaky_relu_02(layer(h, w2_ref, b2_ref))
    h = _leaky_relu_02(layer(h, w3_ref, b3_ref))
    out_ref[...] = layer(h, w4_ref, b4_ref).astype(out_ref.dtype)


def prepare_params(params, compute_dtype=jnp.bfloat16):
    """One-time (offline/cached) param prep: pad hidden/output feature dims to
    128 lanes (n_z left untouched), cast weights to the compute dtype, keep
    biases f32 (added to the f32 accumulator).  Zero padding is exact:
    padded rows/cols are zero and LeakyReLU(0) = 0."""
    n_z, d1 = params["w1"].shape
    d2 = params["w2"].shape[1]
    d3 = params["w3"].shape[1]
    n_input = params["w4"].shape[1]
    d1_p, d2_p, d3_p = (_round_up(d, 128) for d in (d1, d2, d3))
    nin_p = _round_up(n_input, 128)

    prep = {
        "w1": _pad2(params["w1"], n_z, d1_p).astype(compute_dtype),
        "b1": _pad2(params["b1"], 1, d1_p).astype(jnp.float32),
        "w2": _pad2(params["w2"], d1_p, d2_p).astype(compute_dtype),
        "b2": _pad2(params["b2"], 1, d2_p).astype(jnp.float32),
        "w3": _pad2(params["w3"], d2_p, d3_p).astype(compute_dtype),
        "b3": _pad2(params["b3"], 1, d3_p).astype(jnp.float32),
        "w4": _pad2(params["w4"], d3_p, nin_p).astype(compute_dtype),
        "b4": _pad2(params["b4"], 1, nin_p).astype(jnp.float32),
    }
    return prep, n_input


@functools.partial(jax.jit,
                   static_argnames=("tb", "n_input", "out_dtype", "vmem_limit"))
def _ae_decoder_call(z, w1, b1, w2, b2, w3, b3, w4, b4, *,
                     tb, n_input, out_dtype, vmem_limit):
    B, n_z = z.shape
    nin_p = w4.shape[1]
    param_args = (w1, b1, w2, b2, w3, b3, w4, b4)

    grid = (pl.cdiv(B, tb),)   # ragged last block handled by Pallas masking

    z_spec = pl.BlockSpec((tb, n_z), lambda i: (i, 0))
    param_specs = [_const_spec(a.shape) for a in param_args]
    out_spec = pl.BlockSpec((tb, nin_p), lambda i: (i, 0))

    out = pl.pallas_call(
        ae_decoder_kernel,
        out_shape=jax.ShapeDtypeStruct((B, nin_p), out_dtype),
        grid=grid,
        in_specs=[z_spec] + param_specs,
        out_specs=out_spec,
        compiler_params=pltpu.CompilerParams(
            dimension_semantics=("parallel",),
            vmem_limit_bytes=vmem_limit,
        ),
    )(z, *param_args)

    if nin_p != n_input:           # no-op when n_input is already 128-aligned
        out = out[:, :n_input]
    return out


def ae_decoder_forward(z_ae, prep, n_input, *, block_b=1024, out_dtype=None):
    """Forward pass. `prep` comes from prepare_params (pre-padded, pre-cast)."""
    B, n_z = z_ae.shape
    if out_dtype is None:
        out_dtype = prep["w1"].dtype          # bf16 path -> bf16 writeback
    out_dtype = jnp.dtype(out_dtype)

    # >= 2 grid steps once B >= 16 so both v7x TensorCores get work; tile
    # capped by block_b (default 1024: big DMAs on v5e/v6e, <= ~1024 on v7x).
    tb = int(min(_round_up(block_b, 8), max(8, _round_up((B + 1) // 2, 8))))

    # VMEM budget: single-buffered params + double-buffered z/out tiles +
    # f32 intermediate slack, capped at the generation-aware ceiling.
    param_bytes = sum(int(a.size) * a.dtype.itemsize for a in prep.values())
    widths = [prep[k].shape[1] for k in ("w1", "w2", "w3", "w4")]
    nin_p = prep["w4"].shape[1]
    tile_bytes = (2 * tb * n_z * z_ae.dtype.itemsize
                  + 2 * tb * nin_p * out_dtype.itemsize)
    inter_bytes = 6 * tb * max(widths) * 4
    vmem_limit = int(min(_vmem_cap_bytes(),
                         max(8 << 20, param_bytes + tile_bytes + inter_bytes)))

    return _ae_decoder_call(
        z_ae, prep["w1"], prep["b1"], prep["w2"], prep["b2"],
        prep["w3"], prep["b3"], prep["w4"], prep["b4"],
        tb=tb, n_input=n_input, out_dtype=out_dtype, vmem_limit=vmem_limit)


def init_params(key, n_z, ae_n_dec_1, ae_n_dec_2, ae_n_dec_3, n_input):
    """Deterministic synthetic parameters (PyTorch-Linear-like uniform init)."""
    dims = [(n_z, ae_n_dec_1), (ae_n_dec_1, ae_n_dec_2),
            (ae_n_dec_2, ae_n_dec_3), (ae_n_dec_3, n_input)]
    params = {}
    for i, (fan_in, fan_out) in enumerate(dims, start=1):
        key, kw, kb = jax.random.split(key, 3)
        bound = 1.0 / jnp.sqrt(fan_in)
        params[f"w{i}"] = jax.random.uniform(
            kw, (fan_in, fan_out), jnp.float32, minval=-bound, maxval=bound)
        params[f"b{i}"] = jax.random.uniform(
            kb, (1, fan_out), jnp.float32, minval=-bound, maxval=bound)
    return params


def reference_forward(z_ae, params):
    h = z_ae
    for i in (1, 2, 3):
        h = _leaky_relu_02(
            jnp.dot(h, params[f"w{i}"], precision=jax.lax.Precision.HIGHEST)
            + params[f"b{i}"])
    return (jnp.dot(h, params["w4"], precision=jax.lax.Precision.HIGHEST)
            + params["b4"])


if __name__ == "__main__":
    # Shapes consistent with the module: AE_decoder(64, 64, 128, n_input=256, n_z=32)
    B, n_z = 8, 32
    ae_n_dec_1, ae_n_dec_2, ae_n_dec_3, n_input = 64, 64, 128, 256

    key = jax.random.PRNGKey(0)
    key, kz = jax.random.split(key)
    z_ae = jax.random.normal(kz, (B, n_z), jnp.float32)
    params = init_params(key, n_z, ae_n_dec_1, ae_n_dec_2, ae_n_dec_3, n_input)

    x_ref = reference_forward(z_ae, params)

    # 1) f32 weights / f32 output: exact PyTorch-module semantics.
    prep_f32, nin = prepare_params(params, compute_dtype=jnp.float32)
    x_f32 = jax.block_until_ready(ae_decoder_forward(z_ae, prep_f32, nin))
    assert x_f32.shape == (B, n_input) and x_f32.dtype == jnp.float32
    assert jnp.allclose(x_f32, x_ref, atol=1e-4, rtol=1e-4)

    # 2) bf16 weights, f32 MXU accumulation, bf16 writeback (fast path).
    prep_bf16, nin = prepare_params(params, compute_dtype=jnp.bfloat16)
    x_bf16 = jax.block_until_ready(ae_decoder_forward(z_ae, prep_bf16, nin))
    assert x_bf16.shape == (B, n_input) and x_bf16.dtype == jnp.bfloat16
    assert jnp.allclose(x_bf16.astype(jnp.float32), x_ref, atol=5e-2, rtol=5e-2)

    # 3) Larger, non-multiple batch: ragged grid (2 parallel steps), no padding.
    key, kz2 = jax.random.split(key)
    z_big = jax.random.normal(kz2, (1000, n_z), jnp.float32)
    x_big = jax.block_until_ready(ae_decoder_forward(z_big, prep_bf16, nin))
    x_big_ref = reference_forward(z_big, params)
    assert x_big.shape == (1000, n_input)
    assert jnp.allclose(x_big.astype(jnp.float32), x_big_ref, atol=5e-2, rtol=5e-2)

    print("KERNEL_OK")
</pallas_src>

<mosaic_0001>
module attributes {stable_mosaic.version = 11 : i64} {
  func.func @ae_decoder_kernel(%arg0: i32, %arg1: memref<8x32xf32, #tpu.memory_space<vmem>>, %arg2: memref<32x128xf32, #tpu.memory_space<vmem>>, %arg3: memref<1x128xf32, #tpu.memory_space<vmem>>, %arg4: memref<128x128xf32, #tpu.memory_space<vmem>>, %arg5: memref<1x128xf32, #tpu.memory_space<vmem>>, %arg6: memref<128x128xf32, #tpu.memory_space<vmem>>, %arg7: memref<1x128xf32, #tpu.memory_space<vmem>>, %arg8: memref<128x256xf32, #tpu.memory_space<vmem>>, %arg9: memref<1x256xf32, #tpu.memory_space<vmem>>, %arg10: memref<8x256xf32, #tpu.memory_space<vmem>>) attributes {dimension_semantics = [#tpu.dimension_semantics<parallel>], iteration_bounds = array<i64: 1>, scalar_prefetch = 0 : i64, scratch_operands = 0 : i64, tpu.core_type = #tpu.core_type<tc>, window_params = [{transform_indices = @transform_0, window_bounds = array<i64: 8, 32>}, {pipeline_mode = #tpu.pipeline_mode<synchronous>, transform_indices = @transform_1, window_bounds = array<i64: 32, 128>}, {pipeline_mode = #tpu.pipeline_mode<synchronous>, transform_indices = @transform_2, window_bounds = array<i64: 1, 128>}, {pipeline_mode = #tpu.pipeline_mode<synchronous>, transform_indices = @transform_3, window_bounds = array<i64: 128, 128>}, {pipeline_mode = #tpu.pipeline_mode<synchronous>, transform_indices = @transform_4, window_bounds = array<i64: 1, 128>}, {pipeline_mode = #tpu.pipeline_mode<synchronous>, transform_indices = @transform_5, window_bounds = array<i64: 128, 128>}, {pipeline_mode = #tpu.pipeline_mode<synchronous>, transform_indices = @transform_6, window_bounds = array<i64: 1, 128>}, {pipeline_mode = #tpu.pipeline_mode<synchronous>, transform_indices = @transform_7, window_bounds = array<i64: 128, 256>}, {pipeline_mode = #tpu.pipeline_mode<synchronous>, transform_indices = @transform_8, window_bounds = array<i64: 1, 256>}, {transform_indices = @transform_9, window_bounds = array<i64: 8, 256>}]} {
    %c0 = arith.constant 0 : index
    %c0_0 = arith.constant 0 : index
    %0 = vector.load %arg1[%c0, %c0_0] : memref<8x32xf32, #tpu.memory_space<vmem>>, vector<8x32xf32>
    %c0_1 = arith.constant 0 : index
    %c0_2 = arith.constant 0 : index
    %1 = vector.load %arg2[%c0_1, %c0_2] : memref<32x128xf32, #tpu.memory_space<vmem>>, vector<32x128xf32>
    %cst = arith.constant dense<0.000000e+00> : vector<8x128xf32>
    %2 = tpu.matmul %0, %1, %cst {dimension_numbers = #tpu.dot_dimension_numbers<[1], [0], [0], [1], [0, 0, 1, 1], [], []>, precision = #tpu.contract_precision<fp32>} : vector<8x32xf32>, vector<32x128xf32>, vector<8x128xf32> -> vector<8x128xf32>
    %c0_3 = arith.constant 0 : index
    %c0_4 = arith.constant 0 : index
    %3 = vector.load %arg3[%c0_3, %c0_4] : memref<1x128xf32, #tpu.memory_space<vmem>>, vector<1x128xf32>
    %4 = vector.broadcast %3 : vector<1x128xf32> to vector<8x128xf32>
    %5 = arith.addf %2, %4 : vector<8x128xf32>
    %cst_5 = arith.constant 0.000000e+00 : f32
    %6 = vector.broadcast %cst_5 : f32 to vector<8x128xf32>
    %7 = arith.cmpf ogt, %5, %6 : vector<8x128xf32>
    %cst_6 = arith.constant 2.000000e-01 : f32
    %8 = vector.broadcast %cst_6 : f32 to vector<8x128xf32>
    %9 = arith.mulf %8, %5 : vector<8x128xf32>
    %10 = arith.select %7, %5, %9 : vector<8x128xi1>, vector<8x128xf32>
    %c0_7 = arith.constant 0 : index
    %c0_8 = arith.constant 0 : index
    %11 = vector.load %arg4[%c0_7, %c0_8] : memref<128x128xf32, #tpu.memory_space<vmem>>, vector<128x128xf32>
    %cst_9 = arith.constant dense<0.000000e+00> : vector<8x128xf32>
    %12 = tpu.matmul %10, %11, %cst_9 {dimension_numbers = #tpu.dot_dimension_numbers<[1], [0], [0], [1], [0, 0, 1, 1], [], []>, precision = #tpu.contract_precision<fp32>} : vector<8x128xf32>, vector<128x128xf32>, vector<8x128xf32> -> vector<8x128xf32>
    %c0_10 = arith.constant 0 : index
    %c0_11 = arith.constant 0 : index
    %13 = vector.load %arg5[%c0_10, %c0_11] : memref<1x128xf32, #tpu.memory_space<vmem>>, vector<1x128xf32>
    %14 = vector.broadcast %13 : vector<1x128xf32> to vector<8x128xf32>
    %15 = arith.addf %12, %14 : vector<8x128xf32>
    %cst_12 = arith.constant 0.000000e+00 : f32
    %16 = vector.broadcast %cst_12 : f32 to vector<8x128xf32>
    %17 = arith.cmpf ogt, %15, %16 : vector<8x128xf32>
    %cst_13 = arith.constant 2.000000e-01 : f32
    %18 = vector.broadcast %cst_13 : f32 to vector<8x128xf32>
    %19 = arith.mulf %18, %15 : vector<8x128xf32>
    %20 = arith.select %17, %15, %19 : vector<8x128xi1>, vector<8x128xf32>
    %c0_14 = arith.constant 0 : index
    %c0_15 = arith.constant 0 : index
    %21 = vector.load %arg6[%c0_14, %c0_15] : memref<128x128xf32, #tpu.memory_space<vmem>>, vector<128x128xf32>
    %cst_16 = arith.constant dense<0.000000e+00> : vector<8x128xf32>
    %22 = tpu.matmul %20, %21, %cst_16 {dimension_numbers = #tpu.dot_dimension_numbers<[1], [0], [0], [1], [0, 0, 1, 1], [], []>, precision = #tpu.contract_precision<fp32>} : vector<8x128xf32>, vector<128x128xf32>, vector<8x128xf32> -> vector<8x128xf32>
    %c0_17 = arith.constant 0 : index
    %c0_18 = arith.constant 0 : index
    %23 = vector.load %arg7[%c0_17, %c0_18] : memref<1x128xf32, #tpu.memory_space<vmem>>, vector<1x128xf32>
    %24 = vector.broadcast %23 : vector<1x128xf32> to vector<8x128xf32>
    %25 = arith.addf %22, %24 : vector<8x128xf32>
    %cst_19 = arith.constant 0.000000e+00 : f32
    %26 = vector.broadcast %cst_19 : f32 to vector<8x128xf32>
    %27 = arith.cmpf ogt, %25, %26 : vector<8x128xf32>
    %cst_20 = arith.constant 2.000000e-01 : f32
    %28 = vector.broadcast %cst_20 : f32 to vector<8x128xf32>
    %29 = arith.mulf %28, %25 : vector<8x128xf32>
    %30 = arith.select %27, %25, %29 : vector<8x128xi1>, vector<8x128xf32>
    %c0_21 = arith.constant 0 : index
    %c0_22 = arith.constant 0 : index
    %31 = vector.load %arg8[%c0_21, %c0_22] : memref<128x256xf32, #tpu.memory_space<vmem>>, vector<128x256xf32>
    %cst_23 = arith.constant dense<0.000000e+00> : vector<8x256xf32>
    %32 = tpu.matmul %30, %31, %cst_23 {dimension_numbers = #tpu.dot_dimension_numbers<[1], [0], [0], [1], [0, 0, 1, 1], [], []>, precision = #tpu.contract_precision<fp32>} : vector<8x128xf32>, vector<128x256xf32>, vector<8x256xf32> -> vector<8x256xf32>
    %c0_24 = arith.constant 0 : index
    %c0_25 = arith.constant 0 : index
    %33 = vector.load %arg9[%c0_24, %c0_25] : memref<1x256xf32, #tpu.memory_space<vmem>>, vector<1x256xf32>
    %34 = vector.broadcast %33 : vector<1x256xf32> to vector<8x256xf32>
    %35 = arith.addf %32, %34 : vector<8x256xf32>
    %c0_26 = arith.constant 0 : index
    %c0_27 = arith.constant 0 : index
    %36 = vector.load %arg10[%c0_26, %c0_27] : memref<8x256xf32, #tpu.memory_space<vmem>>, vector<8x256xf32>
    tpu.vector_store %arg10[%c0_26, %c0_27], %35 {strides = array<i32>} : memref<8x256xf32, #tpu.memory_space<vmem>>, vector<8x256xf32>,
    return
  }
  func.func @transform_0(%arg0: i32) -> (i32, i32) {
    %c0_i32 = arith.constant 0 : i32
    %c0_i32_0 = arith.constant 0 : i32
    return %arg0, %c0_i32 : i32, i32
  }
  func.func @transform_1(%arg0: i32) -> (i32, i32) {
    %c0_i32 = arith.constant 0 : i32
    %c0_i32_0 = arith.constant 0 : i32
    %c0_i32_1 = arith.constant 0 : i32
    return %c0_i32, %c0_i32_0 : i32, i32
  }
  func.func @transform_2(%arg0: i32) -> (i32, i32) {
    %c0_i32 = arith.constant 0 : i32
    %c0_i32_0 = arith.constant 0 : i32
    %c0_i32_1 = arith.constant 0 : i32
    return %c0_i32, %c0_i32_0 : i32, i32
  }
  func.func @transform_3(%arg0: i32) -> (i32, i32) {
    %c0_i32 = arith.constant 0 : i32
    %c0_i32_0 = arith.constant 0 : i32
    %c0_i32_1 = arith.constant 0 : i32
    return %c0_i32, %c0_i32_0 : i32, i32
  }
  func.func @transform_4(%arg0: i32) -> (i32, i32) {
    %c0_i32 = arith.constant 0 : i32
    %c0_i32_0 = arith.constant 0 : i32
    %c0_i32_1 = arith.constant 0 : i32
    return %c0_i32, %c0_i32_0 : i32, i32
  }
  func.func @transform_5(%arg0: i32) -> (i32, i32) {
    %c0_i32 = arith.constant 0 : i32
    %c0_i32_0 = arith.constant 0 : i32
    %c0_i32_1 = arith.constant 0 : i32
    return %c0_i32, %c0_i32_0 : i32, i32
  }
  func.func @transform_6(%arg0: i32) -> (i32, i32) {
    %c0_i32 = arith.constant 0 : i32
    %c0_i32_0 = arith.constant 0 : i32
    %c0_i32_1 = arith.constant 0 : i32
    return %c0_i32, %c0_i32_0 : i32, i32
  }
  func.func @transform_7(%arg0: i32) -> (i32, i32) {
    %c0_i32 = arith.constant 0 : i32
    %c0_i32_0 = arith.constant 0 : i32
    %c0_i32_1 = arith.constant 0 : i32
    return %c0_i32, %c0_i32_0 : i32, i32
  }
  func.func @transform_8(%arg0: i32) -> (i32, i32) {
    %c0_i32 = arith.constant 0 : i32
    %c0_i32_0 = arith.constant 0 : i32
    %c0_i32_1 = arith.constant 0 : i32
    return %c0_i32, %c0_i32_0 : i32, i32
  }
  func.func @transform_9(%arg0: i32) -> (i32, i32) {
    %c0_i32 = arith.constant 0 : i32
    %c0_i32_0 = arith.constant 0 : i32
    return %arg0, %c0_i32 : i32, i32
  }
}

</mosaic_0001>

<llo_original>
// kernel: _ae_decoder_call.1
$region0: #{_ae_decoder_call.1}
  #allocation0 [shape = 'u32[]', space=smem, size = 0x4, offset = 0x4, fixed_abs, tag = 'smem constant byte address 0x4 - core index']
  #allocation1 [shape = 'u32[144,128]{1,0:T(1,128)}', space=vmem, size = 0x12000, scoped, tag = 'internal scratch']
  %s0 = inlined_call_operand.hbm [shape: f32[8,32], index: 0, kind: input, shape index: {}]
  %s1 = inlined_call_operand.hbm [shape: f32[32,128], index: 1, kind: input, shape index: {}]
  %s2 = inlined_call_operand.vmem [shape: f32[1,128], index: 2, kind: input, shape index: {}]
  %s3 = inlined_call_operand.hbm [shape: f32[128,128], index: 3, kind: input, shape index: {}]
  %s4 = inlined_call_operand.vmem [shape: f32[1,128], index: 4, kind: input, shape index: {}]
  %s5 = inlined_call_operand.hbm [shape: f32[128,128], index: 5, kind: input, shape index: {}]
  %s6 = inlined_call_operand.vmem [shape: f32[1,128], index: 6, kind: input, shape index: {}]
  %s7 = inlined_call_operand.hbm [shape: f32[128,256], index: 7, kind: input, shape index: {}]
  %s8 = inlined_call_operand.vmem [shape: f32[1,256], index: 8, kind: input, shape index: {}]
  %s9 = inlined_call_operand.hbm [shape: f32[8,256], index: 9, kind: output, shape index: {}]
  %s10 = sld [smem:[#allocation0]]
  $region66: #{_ae_decoder_call.1} parent=0
    _
  %s12 = ssub.s32 1, %s10
  %s13 = scalar_select 0, %s12, %s10
  $region1: #{_ae_decoder_call.1} parent=0
    #allocation2 [shape = 'u8[4096]{0}', space=vmem, size = 0x1000, scoped, tag = 'input window, operand 0, single buffered']
    #allocation3 [shape = 's32[1]{0}', space=sflag, size = 0x4, scoped, tag = 'scoped memory for _ae_decoder_call.1']
    #allocation4 [shape = 's32[1]{0}', space=sflag, size = 0x4, scoped, tag = 'scoped memory for _ae_decoder_call.1']
    #allocation5 [shape = 'u8[16384]{0}', space=vmem, size = 0x4000, scoped, tag = 'input window, operand 1, single buffered']
    #allocation6 [shape = 's32[1]{0}', space=sflag, size = 0x4, scoped, tag = 'scoped memory for _ae_decoder_call.1']
    #allocation7 [shape = 'u8[65536]{0}', space=vmem, size = 0x10000, scoped, tag = 'input window, operand 3, single buffered']
    #allocation8 [shape = 'u8[65536]{0}', space=vmem, size = 0x10000, scoped, tag = 'input window, operand 5, single buffered']
    #allocation9 [shape = 's32[1]{0}', space=sflag, size = 0x4, scoped, tag = 'scoped memory for _ae_decoder_call.1']
    #allocation10 [shape = 'u8[131072]{0}', space=vmem, size = 0x20000, scoped, tag = 'input window, operand 7, single buffered']
    #allocation11 [shape = 'u8[8192]{0}', space=vmem, size = 0x2000, scoped, tag = 'output window, operand 0, single buffered']
    %14 = vsyncpa [#allocation3], 0
    %15 = vsyncpa [#allocation6], 0
    %16 = vsyncpa [#allocation9], 0
    %17 = vsyncpa [#allocation4], 0
    // Predicated region
    $region2: #{_ae_decoder_call.1} parent=1 // pred_check
      _
    $region3: #{_ae_decoder_call.1} parent=1 // pred_check_branch
      %19 = sbr.rel (0) target = $region5
    $region4: #{_ae_decoder_call.1} parent=1 // pred_region
      %s21 = ssub.s32 128, 128
      %22 = vsyncadd [#allocation3], %s21
      %s24 = sshll.u32 [#allocation2], 4
      %s25 = int_to_ptr.vmem [resolvable:$true] %s24
      %27 = dma.hbm_to_vmem [thread:$0]  %s0, 128, %s25, [#allocation3]
    $region5: #{_ae_decoder_call.1} parent=1 // pred_fallthru
      _
    // Predicated region
    $region6: #{_ae_decoder_call.1} parent=1 // pred_check
      _
    $region7: #{_ae_decoder_call.1} parent=1 // pred_check_branch
      %29 = sbr.rel (0) target = $region9
    $region8: #{_ae_decoder_call.1} parent=1 // pred_region
      %s31 = ssub.s32 512, 512
      %32 = vsyncadd [#allocation6], %s31
      %s33 = sshll.u32 [#allocation5], 4
      %s34 = int_to_ptr.vmem [resolvable:$true] %s33
      %39 = dma.hbm_to_vmem [thread:$0]  %s1, 512, %s34, [#allocation6], 128, 128, 8
    $region9: #{_ae_decoder_call.1} parent=1 // pred_fallthru
      _
    // Predicated region
    $region10: #{_ae_decoder_call.1} parent=1 // pred_check
      _
    $region11: #{_ae_decoder_call.1} parent=1 // pred_check_branch
      %41 = sbr.rel (0) target = $region13
    $region12: #{_ae_decoder_call.1} parent=1 // pred_region
      _
    $region13: #{_ae_decoder_call.1} parent=1 // pred_fallthru
      _
    // Predicated region
    $region14: #{_ae_decoder_call.1} parent=1 // pred_check
      _
    $region15: #{_ae_decoder_call.1} parent=1 // pred_check_branch
      %43 = sbr.rel (0) target = $region17
    $region16: #{_ae_decoder_call.1} parent=1 // pred_region
      %s45 = ssub.s32 2048, 2048
      %46 = vsyncadd [#allocation6], %s45
      %s47 = sshll.u32 [#allocation7], 4
      %s48 = int_to_ptr.vmem [resolvable:$true] %s47
      %53 = dma.hbm_to_vmem [thread:$0]  %s3, 2048, %s48, [#allocation6], 128, 128, 8
    $region17: #{_ae_decoder_call.1} parent=1 // pred_fallthru
      _
    // Predicated region
    $region18: #{_ae_decoder_call.1} parent=1 // pred_check
      _
    $region19: #{_ae_decoder_call.1} parent=1 // pred_check_branch
      %55 = sbr.rel (0) target = $region21
    $region20: #{_ae_decoder_call.1} parent=1 // pred_region
      _
    $region21: #{_ae_decoder_call.1} parent=1 // pred_fallthru
      _
    // Predicated region
    $region22: #{_ae_decoder_call.1} parent=1 // pred_check
      _
    $region23: #{_ae_decoder_call.1} parent=1 // pred_check_branch
      %57 = sbr.rel (0) target = $region25
    $region24: #{_ae_decoder_call.1} parent=1 // pred_region
      %s59 = ssub.s32 2048, 2048
      %60 = vsyncadd [#allocation9], %s59
      %s61 = sshll.u32 [#allocation8], 4
      %s62 = int_to_ptr.vmem [resolvable:$true] %s61
      %67 = dma.hbm_to_vmem [thread:$0]  %s5, 2048, %s62, [#allocation9], 128, 128, 8
    $region25: #{_ae_decoder_call.1} parent=1 // pred_fallthru
      _
    // Predicated region
    $region26: #{_ae_decoder_call.1} parent=1 // pred_check
      _
    $region27: #{_ae_decoder_call.1} parent=1 // pred_check_branch
      %69 = sbr.rel (0) target = $region29
    $region28: #{_ae_decoder_call.1} parent=1 // pred_region
      _
    $region29: #{_ae_decoder_call.1} parent=1 // pred_fallthru
      _
    // Predicated region
    $region30: #{_ae_decoder_call.1} parent=1 // pred_check
      _
    $region31: #{_ae_decoder_call.1} parent=1 // pred_check_branch
      %71 = sbr.rel (0) target = $region33
    $region32: #{_ae_decoder_call.1} parent=1 // pred_region
      %s73 = ssub.s32 4096, 4096
      %74 = vsyncadd [#allocation9], %s73
      %s75 = sshll.u32 [#allocation10], 4
      %s76 = int_to_ptr.vmem [resolvable:$true] %s75
      %81 = dma.hbm_to_vmem [thread:$0]  %s7, 4096, %s76, [#allocation9], 256, 256, 16
    $region33: #{_ae_decoder_call.1} parent=1 // pred_fallthru
      _
    // Predicated region
    $region34: #{_ae_decoder_call.1} parent=1 // pred_check
      _
    $region35: #{_ae_decoder_call.1} parent=1 // pred_check_branch
      %83 = sbr.rel (0) target = $region37
    $region36: #{_ae_decoder_call.1} parent=1 // pred_region
      _
    $region37: #{_ae_decoder_call.1} parent=1 // pred_fallthru
      _
    // Predicated region
    $region38: #{_ae_decoder_call.1} parent=1 // pred_check
      _
    $region39: #{_ae_decoder_call.1} parent=1 // pred_check_branch
      %85 = sbr.rel (0) target = $region41
    $region40: #{_ae_decoder_call.1} parent=1 // pred_region
      %86 = dma.done [#allocation3], 128
    $region41: #{_ae_decoder_call.1} parent=1 // pred_fallthru
      _
    // Predicated region
    $region42: #{_ae_decoder_call.1} parent=1 // pred_check
      _
    $region43: #{_ae_decoder_call.1} parent=1 // pred_check_branch
      %88 = sbr.rel (0) target = $region45
    $region44: #{_ae_decoder_call.1} parent=1 // pred_region
      %89 = dma.done [#allocation6], 512
    $region45: #{_ae_decoder_call.1} parent=1 // pred_fallthru
      _
    // Predicated region
    $region46: #{_ae_decoder_call.1} parent=1 // pred_check
      _
    $region47: #{_ae_decoder_call.1} parent=1 // pred_check_branch
      %91 = sbr.rel (0) target = $region49
    $region48: #{_ae_decoder_call.1} parent=1 // pred_region
      %92 = dma.done [#allocation6], 2048
    $region49: #{_ae_decoder_call.1} parent=1 // pred_fallthru
      _
    // Predicated region
    $region50: #{_ae_decoder_call.1} parent=1 // pred_check
      _
    $region51: #{_ae_decoder_call.1} parent=1 // pred_check_branch
      %94 = sbr.rel (0) target = $region53
    $region52: #{_ae_decoder_call.1} parent=1 // pred_region
      %95 = dma.done [#allocation9], 2048
    $region53: #{_ae_decoder_call.1} parent=1 // pred_fallthru
      _
    // Predicated region
    $region54: #{_ae_decoder_call.1} parent=1 // pred_check
      _
    $region55: #{_ae_decoder_call.1} parent=1 // pred_check_branch
      %97 = sbr.rel (0) target = $region57
    $region56: #{_ae_decoder_call.1} parent=1 // pred_region
      %98 = dma.done [#allocation9], 4096
    $region57: #{_ae_decoder_call.1} parent=1 // pred_fallthru
      _
    %v99 = vld [vmem:[#allocation2] sm:$0xff]
    %v100 = vld [vmem:[#allocation5] sm:$0xff]
    %v101 = vld [vmem:[#allocation5 + $0x8] sm:$0xff]
    %v102 = vld [vmem:[#allocation5 + $0x10] sm:$0xff]
    %v103 = vld [vmem:[#allocation5 + $0x18] sm:$0xff]
    %v104 = vld [vmem:[%s2] sm:$0x1]
    %v106 = vlaneseq
    %v107 = vshrl.u32 %v106, 7
    %v108 = vsub.s32 0, %v107
    %v109 = vrot.slane %v104, %v108
    %vm111 = vcmask 261120
    %v113 = vsel %vm111, %v99, 0
    %115 = vmatprep.subr.mxu0 0.0
    %116 = vmatpush1.msra.mxu0 0.0
    %117 = vmatprep.subr.mxu0 0.0
    %118 = vmatpush1.msra.mxu0 0.0
    %119 = vmatprep.subr.mxu0 0.0
    %120 = vmatpush1.msra.mxu0 0.0
    %121 = vmatprep.subr.mxu0 0.0
    %122 = vmatpush1.msra.mxu0 0.0
    %123 = vmatprep.subr.mxu0 0.0
    %124 = vmatpush1.msra.mxu0 0.0
    %125 = vmatprep.subr.mxu0 0.0
    %126 = vmatpush1.msra.mxu0 0.0
    %127 = vmatprep.subr.mxu0 0.0
    %128 = vmatpush1.msra.mxu0 0.0
    %129 = vmatprep.subr.mxu0 0.0
    %130 = vmatpush1.msra.mxu0 0.0
    %131 = vmatprep.subr.mxu0 0.0
    %132 = vmatpush1.msra.mxu0 0.0
    %133 = vmatprep.subr.mxu0 0.0
    %134 = vmatpush1.msra.mxu0 0.0
    %135 = vmatprep.subr.mxu0 0.0
    %136 = vmatpush1.msra.mxu0 0.0
    %137 = vmatprep.subr.mxu0 0.0
    %138 = vmatpush1.msra.mxu0 0.0
    %139 = vmatprep.subr.mxu0 0.0
    %v140 = vand.u32 %v103, 4294901760
    %141 = vmatpush1.msra.mxu0 %v140
    %142 = vmatprep.subr.mxu0 0.0
    %v143 = vand.u32 %v102, 4294901760
    %144 = vmatpush1.msra.mxu0 %v143
    %145 = vmatprep.subr.mxu0 0.0
    %v146 = vand.u32 %v101, 4294901760
    %147 = vmatpush1.msra.mxu0 %v146
    %148 = vmatprep.subr.mxu0 0.0
    %v149 = vand.u32 %v100, 4294901760
    %150 = vmatpush1.msra.mxu0 %v149
    %151 = vmatprep.subr.mxu0 0.0
    %152 = vmatpush2.msra.mxu0 0.0
    %153 = vmatprep.subr.mxu0 0.0
    %154 = vmatpush2.msra.mxu0 0.0
    %155 = vmatprep.subr.mxu0 0.0
    %156 = vmatpush2.msra.mxu0 0.0
    %157 = vmatprep.subr.mxu0 0.0
    %158 = vmatpush2.msra.mxu0 0.0
    %159 = vmatprep.subr.mxu0 0.0
    %160 = vmatpush2.msra.mxu0 0.0
    %161 = vmatprep.subr.mxu0 0.0
    %162 = vmatpush2.msra.mxu0 0.0
    %163 = vmatprep.subr.mxu0 0.0
    %164 = vmatpush2.msra.mxu0 0.0
    %165 = vmatprep.subr.mxu0 0.0
    %166 = vmatpush2.msra.mxu0 0.0
    %167 = vmatprep.subr.mxu0 0.0
    %168 = vmatpush2.msra.mxu0 0.0
    %169 = vmatprep.subr.mxu0 0.0
    %170 = vmatpush2.msra.mxu0 0.0
    %171 = vmatprep.subr.mxu0 0.0
    %172 = vmatpush2.msra.mxu0 0.0
    %173 = vmatprep.subr.mxu0 0.0
    %174 = vmatpush2.msra.mxu0 0.0
    %175 = vmatprep.subr.mxu0 0.0
    %176 = vmatpush2.msra.mxu0 0.0
    %177 = vmatprep.subr.mxu0 0.0
    %178 = vmatpush2.msra.mxu0 0.0
    %179 = vmatprep.subr.mxu0 0.0
    %180 = vmatpush2.msra.mxu0 0.0
    %181 = vmatprep.subr.mxu0 0.0
    %182 = vmatpush2.msra.mxu0 0.0
    %183 = vmatprep.mubr.f32.mxu0 0.0
    %v184 = vand.u32 %v113, 4294901760
    %v185 = vsub.f32 %v113, %v184
    %v186 = vand.u32 %v185, 4294901760
    %v187 = vsub.f32 %v185, %v186
    %v188 = vand.u32 %v187, 4294901760
    %189 = vmatmul.mubr.f32.gmra.mxu0 %v188
    %v190 = vpop.f32.mrf.mxu0
    %v191 = vadd.f32 %v109, %v190
    %v192 = vpop.f32.mrf.mxu0
    %193 = vdwg.mxu0
    %194 = vmatprep.subr.mxu0 0.0
    %195 = vmatpush1.msra.mxu0 0.0
    %196 = vmatprep.subr.mxu0 0.0
    %197 = vmatpush1.msra.mxu0 0.0
    %198 = vmatprep.subr.mxu0 0.0
    %199 = vmatpush1.msra.mxu0 0.0
    %200 = vmatprep.subr.mxu0 0.0
    %201 = vmatpush1.msra.mxu0 0.0
    %202 = vmatprep.subr.mxu0 0.0
    %203 = vmatpush1.msra.mxu0 0.0
    %204 = vmatprep.subr.mxu0 0.0
    %205 = vmatpush1.msra.mxu0 0.0
    %206 = vmatprep.subr.mxu0 0.0
    %207 = vmatpush1.msra.mxu0 0.0
    %208 = vmatprep.subr.mxu0 0.0
    %209 = vmatpush1.msra.mxu0 0.0
    %210 = vmatprep.subr.mxu0 0.0
    %211 = vmatpush1.msra.mxu0 0.0
    %212 = vmatprep.subr.mxu0 0.0
    %213 = vmatpush1.msra.mxu0 0.0
    %214 = vmatprep.subr.mxu0 0.0
    %215 = vmatpush1.msra.mxu0 0.0
    %216 = vmatprep.subr.mxu0 0.0
    %217 = vmatpush1.msra.mxu0 0.0
    %218 = vmatprep.subr.mxu0 0.0
    %v219 = vand.u32 %v103, 4294901760
    %v220 = vsub.f32 %v103, %v219
    %v221 = vand.u32 %v220, 4294901760
    %v222 = vsub.f32 %v220, %v221
    %v223 = vand.u32 %v222, 4294901760
    %224 = vmatpush1.msra.mxu0 %v223
    %225 = vmatprep.subr.mxu0 0.0
    %v226 = vand.u32 %v102, 4294901760
    %v227 = vsub.f32 %v102, %v226
    %v228 = vand.u32 %v227, 4294901760
    %v229 = vsub.f32 %v227, %v228
    %v230 = vand.u32 %v229, 4294901760
    %231 = vmatpush1.msra.mxu0 %v230
    %232 = vmatprep.subr.mxu0 0.0
    %v233 = vand.u32 %v101, 4294901760
    %v234 = vsub.f32 %v101, %v233
    %v235 = vand.u32 %v234, 4294901760
    %v236 = vsub.f32 %v234, %v235
    %v237 = vand.u32 %v236, 4294901760
    %238 = vmatpush1.msra.mxu0 %v237
    %239 = vmatprep.subr.mxu0 0.0
    %v240 = vand.u32 %v100, 4294901760
    %v241 = vsub.f32 %v100, %v240
    %v242 = vand.u32 %v241, 4294901760
    %v243 = vsub.f32 %v241, %v242
    %v244 = vand.u32 %v243, 4294901760
    %245 = vmatpush1.msra.mxu0 %v244
    %246 = vmatprep.subr.mxu0 0.0
    %247 = vmatpush2.msra.mxu0 0.0
    %248 = vmatprep.subr.mxu0 0.0
    %249 = vmatpush2.msra.mxu0 0.0
    %250 = vmatprep.subr.mxu0 0.0
    %251 = vmatpush2.msra.mxu0 0.0
    %252 = vmatprep.subr.mxu0 0.0
    %253 = vmatpush2.msra.mxu0 0.0
    %254 = vmatprep.subr.mxu0 0.0
    %255 = vmatpush2.msra.mxu0 0.0
    %256 = vmatprep.subr.mxu0 0.0
    %257 = vmatpush2.msra.mxu0 0.0
    %258 = vmatprep.subr.mxu0 0.0
    %259 = vmatpush2.msra.mxu0 0.0
    %260 = vmatprep.subr.mxu0 0.0
    %261 = vmatpush2.msra.mxu0 0.0
    %262 = vmatprep.subr.mxu0 0.0
    %263 = vmatpush2.msra.mxu0 0.0
    %264 = vmatprep.subr.mxu0 0.0
    %265 = vmatpush2.msra.mxu0 0.0
    %266 = vmatprep.subr.mxu0 0.0
    %267 = vmatpush2.msra.mxu0 0.0
    %268 = vmatprep.subr.mxu0 0.0
    %269 = vmatpush2.msra.mxu0 0.0
    %270 = vmatprep.subr.mxu0 0.0
    %271 = vmatpush2.msra.mxu0 0.0
    %272 = vmatprep.subr.mxu0 0.0
    %273 = vmatpush2.msra.mxu0 0.0
    %274 = vmatprep.subr.mxu0 0.0
    %275 = vmatpush2.msra.mxu0 0.0
    %276 = vmatprep.subr.mxu0 0.0
    %277 = vmatpush2.msra.mxu0 0.0
    %278 = vmatprep.mubr.f32.mxu0 0.0
    %v279 = vand.u32 %v113, 4294901760
    %280 = vmatmul.mubr.f32.gmra.mxu0 %v279
    %v281 = vpop.f32.mrf.mxu0
    %v282 = vadd.f32 %v191, %v281
    %v283 = vpop.f32.mrf.mxu0
    %284 = vdwg.mxu0
    %285 = vmatprep.subr.mxu0 0.0
    %286 = vmatpush1.msra.mxu0 0.0
    %287 = vmatprep.subr.mxu0 0.0
    %288 = vmatpush1.msra.mxu0 0.0
    %289 = vmatprep.subr.mxu0 0.0
    %290 = vmatpush1.msra.mxu0 0.0
    %291 = vmatprep.subr.mxu0 0.0
    %292 = vmatpush1.msra.mxu0 0.0
    %293 = vmatprep.subr.mxu0 0.0
    %294 = vmatpush1.msra.mxu0 0.0
    %295 = vmatprep.subr.mxu0 0.0
    %296 = vmatpush1.msra.mxu0 0.0
    %297 = vmatprep.subr.mxu0 0.0
    %298 = vmatpush1.msra.mxu0 0.0
    %299 = vmatprep.subr.mxu0 0.0
    %300 = vmatpush1.msra.mxu0 0.0
    %301 = vmatprep.subr.mxu0 0.0
    %302 = vmatpush1.msra.mxu0 0.0
    %303 = vmatprep.subr.mxu0 0.0
    %304 = vmatpush1.msra.mxu0 0.0
    %305 = vmatprep.subr.mxu0 0.0
    %306 = vmatpush1.msra.mxu0 0.0
    %307 = vmatprep.subr.mxu0 0.0
    %308 = vmatpush1.msra.mxu0 0.0
    %309 = vmatprep.subr.mxu0 0.0
    %v310 = vand.u32 %v103, 4294901760
    %v311 = vsub.f32 %v103, %v310
    %312 = vmatpush1.msra.mxu0 %v311
    %313 = vmatprep.subr.mxu0 0.0
    %v314 = vand.u32 %v102, 4294901760
    %v315 = vsub.f32 %v102, %v314
    %316 = vmatpush1.msra.mxu0 %v315
    %317 = vmatprep.subr.mxu0 0.0
    %v318 = vand.u32 %v101, 4294901760
    %v319 = vsub.f32 %v101, %v318
    %320 = vmatpush1.msra.mxu0 %v319
    %321 = vmatprep.subr.mxu0 0.0
    %v322 = vand.u32 %v100, 4294901760
    %v323 = vsub.f32 %v100, %v322
    %324 = vmatpush1.msra.mxu0 %v323
    %325 = vmatprep.subr.mxu0 0.0
    %326 = vmatpush2.msra.mxu0 0.0
    %327 = vmatprep.subr.mxu0 0.0
    %328 = vmatpush2.msra.mxu0 0.0
    %329 = vmatprep.subr.mxu0 0.0
    %330 = vmatpush2.msra.mxu0 0.0
    %331 = vmatprep.subr.mxu0 0.0
    %332 = vmatpush2.msra.mxu0 0.0
    %333 = vmatprep.subr.mxu0 0.0
    %334 = vmatpush2.msra.mxu0 0.0
    %335 = vmatprep.subr.mxu0 0.0
    %336 = vmatpush2.msra.mxu0 0.0
    %337 = vmatprep.subr.mxu0 0.0
    %338 = vmatpush2.msra.mxu0 0.0
    %339 = vmatprep.subr.mxu0 0.0
    %340 = vmatpush2.msra.mxu0 0.0
    %341 = vmatprep.subr.mxu0 0.0
    %342 = vmatpush2.msra.mxu0 0.0
    %343 = vmatprep.subr.mxu0 0.0
    %344 = vmatpush2.msra.mxu0 0.0
    %345 = vmatprep.subr.mxu0 0.0
    %346 = vmatpush2.msra.mxu0 0.0
    %347 = vmatprep.subr.mxu0 0.0
    %348 = vmatpush2.msra.mxu0 0.0
    %349 = vmatprep.subr.mxu0 0.0
    %350 = vmatpush2.msra.mxu0 0.0
    %351 = vmatprep.subr.mxu0 0.0
    %352 = vmatpush2.msra.mxu0 0.0
    %353 = vmatprep.subr.mxu0 0.0
    %354 = vmatpush2.msra.mxu0 0.0
    %355 = vmatprep.subr.mxu0 0.0
    %356 = vmatpush2.msra.mxu0 0.0
    %357 = vmatprep.mubr.f32.mxu0 0.0
    %v358 = vand.u32 %v113, 4294901760
    %v359 = vsub.f32 %v113, %v358
    %360 = vmatmul.mubr.f32.gmra.mxu0 %v359
    %v361 = vpop.f32.mrf.mxu0
    %v362 = vadd.f32 %v282, %v361
    %v363 = vpop.f32.mrf.mxu0
    %364 = vdwg.mxu0
    %365 = vmatprep.subr.mxu0 0.0
    %366 = vmatpush1.msra.mxu0 0.0
    %367 = vmatprep.subr.mxu0 0.0
    %368 = vmatpush1.msra.mxu0 0.0
    %369 = vmatprep.subr.mxu0 0.0
    %370 = vmatpush1.msra.mxu0 0.0
    %371 = vmatprep.subr.mxu0 0.0
    %372 = vmatpush1.msra.mxu0 0.0
    %373 = vmatprep.subr.mxu0 0.0
    %374 = vmatpush1.msra.mxu0 0.0
    %375 = vmatprep.subr.mxu0 0.0
    %376 = vmatpush1.msra.mxu0 0.0
    %377 = vmatprep.subr.mxu0 0.0
    %378 = vmatpush1.msra.mxu0 0.0
    %379 = vmatprep.subr.mxu0 0.0
    %380 = vmatpush1.msra.mxu0 0.0
    %381 = vmatprep.subr.mxu0 0.0
    %382 = vmatpush1.msra.mxu0 0.0
    %383 = vmatprep.subr.mxu0 0.0
    %384 = vmatpush1.msra.mxu0 0.0
    %385 = vmatprep.subr.mxu0 0.0
    %386 = vmatpush1.msra.mxu0 0.0
    %387 = vmatprep.subr.mxu0 0.0
    %388 = vmatpush1.msra.mxu0 0.0
    %389 = vmatprep.subr.mxu0 0.0
    %v390 = vand.u32 %v103, 4294901760
    %391 = vmatpush1.msra.mxu0 %v390
    %392 = vmatprep.subr.mxu0 0.0
    %v393 = vand.u32 %v102, 4294901760
    %394 = vmatpush1.msra.mxu0 %v393
    %395 = vmatprep.subr.mxu0 0.0
    %v396 = vand.u32 %v101, 4294901760
    %397 = vmatpush1.msra.mxu0 %v396
    %398 = vmatprep.subr.mxu0 0.0
    %v399 = vand.u32 %v100, 4294901760
    %400 = vmatpush1.msra.mxu0 %v399
    %401 = vmatprep.subr.mxu0 0.0
    %402 = vmatpush2.msra.mxu0 0.0
    %403 = vmatprep.subr.mxu0 0.0
    %404 = vmatpush2.msra.mxu0 0.0
    %405 = vmatprep.subr.mxu0 0.0
    %406 = vmatpush2.msra.mxu0 0.0
    %407 = vmatprep.subr.mxu0 0.0
    %408 = vmatpush2.msra.mxu0 0.0
    %409 = vmatprep.subr.mxu0 0.0
    %410 = vmatpush2.msra.mxu0 0.0
    %411 = vmatprep.subr.mxu0 0.0
    %412 = vmatpush2.msra.mxu0 0.0
    %413 = vmatprep.subr.mxu0 0.0
    %414 = vmatpush2.msra.mxu0 0.0
    %415 = vmatprep.subr.mxu0 0.0
    %416 = vmatpush2.msra.mxu0 0.0
    %417 = vmatprep.subr.mxu0 0.0
    %418 = vmatpush2.msra.mxu0 0.0
    %419 = vmatprep.subr.mxu0 0.0
    %420 = vmatpush2.msra.mxu0 0.0
    %421 = vmatprep.subr.mxu0 0.0
    %422 = vmatpush2.msra.mxu0 0.0
    %423 = vmatprep.subr.mxu0 0.0
    %424 = vmatpush2.msra.mxu0 0.0
    %425 = vmatprep.subr.mxu0 0.0
    %426 = vmatpush2.msra.mxu0 0.0
    %427 = vmatprep.subr.mxu0 0.0
    %428 = vmatpush2.msra.mxu0 0.0
    %429 = vmatprep.subr.mxu0 0.0
    %430 = vmatpush2.msra.mxu0 0.0
    %431 = vmatprep.subr.mxu0 0.0
    %432 = vmatpush2.msra.mxu0 0.0
    %433 = vmatprep.mubr.f32.mxu0 0.0
    %v434 = vand.u32 %v113, 4294901760
    %v435 = vsub.f32 %v113, %v434
    %v436 = vand.u32 %v435, 4294901760
    %437 = vmatmul.mubr.f32.gmra.mxu0 %v436
    %v438 = vpop.f32.mrf.mxu0
    %v439 = vadd.f32 %v362, %v438
    %v440 = vpop.f32.mrf.mxu0
    %441 = vdwg.mxu0
    %442 = vmatprep.subr.mxu0 0.0
    %443 = vmatpush1.msra.mxu0 0.0
    %444 = vmatprep.subr.mxu0 0.0
    %445 = vmatpush1.msra.mxu0 0.0
    %446 = vmatprep.subr.mxu0 0.0
    %447 = vmatpush1.msra.mxu0 0.0
    %448 = vmatprep.subr.mxu0 0.0
    %449 = vmatpush1.msra.mxu0 0.0
    %450 = vmatprep.subr.mxu0 0.0
    %451 = vmatpush1.msra.mxu0 0.0
    %452 = vmatprep.subr.mxu0 0.0
    %453 = vmatpush1.msra.mxu0 0.0
    %454 = vmatprep.subr.mxu0 0.0
    %455 = vmatpush1.msra.mxu0 0.0
    %456 = vmatprep.subr.mxu0 0.0
    %457 = vmatpush1.msra.mxu0 0.0
    %458 = vmatprep.subr.mxu0 0.0
    %459 = vmatpush1.msra.mxu0 0.0
    %460 = vmatprep.subr.mxu0 0.0
    %461 = vmatpush1.msra.mxu0 0.0
    %462 = vmatprep.subr.mxu0 0.0
    %463 = vmatpush1.msra.mxu0 0.0
    %464 = vmatprep.subr.mxu0 0.0
    %465 = vmatpush1.msra.mxu0 0.0
    %466 = vmatprep.subr.mxu0 0.0
    %v467 = vand.u32 %v103, 4294901760
    %v468 = vsub.f32 %v103, %v467
    %v469 = vand.u32 %v468, 4294901760
    %470 = vmatpush1.msra.mxu0 %v469
    %471 = vmatprep.subr.mxu0 0.0
    %v472 = vand.u32 %v102, 4294901760
    %v473 = vsub.f32 %v102, %v472
    %v474 = vand.u32 %v473, 4294901760
    %475 = vmatpush1.msra.mxu0 %v474
    %476 = vmatprep.subr.mxu0 0.0
    %v477 = vand.u32 %v101, 4294901760
    %v478 = vsub.f32 %v101, %v477
    %v479 = vand.u32 %v478, 4294901760
    %480 = vmatpush1.msra.mxu0 %v479
    %481 = vmatprep.subr.mxu0 0.0
    %v482 = vand.u32 %v100, 4294901760
    %v483 = vsub.f32 %v100, %v482
    %v484 = vand.u32 %v483, 4294901760
    %485 = vmatpush1.msra.mxu0 %v484
    %486 = vmatprep.subr.mxu0 0.0
    %487 = vmatpush2.msra.mxu0 0.0
    %488 = vmatprep.subr.mxu0 0.0
    %489 = vmatpush2.msra.mxu0 0.0
    %490 = vmatprep.subr.mxu0 0.0
    %491 = vmatpush2.msra.mxu0 0.0
    %492 = vmatprep.subr.mxu0 0.0
    %493 = vmatpush2.msra.mxu0 0.0
    %494 = vmatprep.subr.mxu0 0.0
    %495 = vmatpush2.msra.mxu0 0.0
    %496 = vmatprep.subr.mxu0 0.0
    %497 = vmatpush2.msra.mxu0 0.0
    %498 = vmatprep.subr.mxu0 0.0
    %499 = vmatpush2.msra.mxu0 0.0
    %500 = vmatprep.subr.mxu0 0.0
    %501 = vmatpush2.msra.mxu0 0.0
    %502 = vmatprep.subr.mxu0 0.0
    %503 = vmatpush2.msra.mxu0 0.0
    %504 = vmatprep.subr.mxu0 0.0
    %505 = vmatpush2.msra.mxu0 0.0
    %506 = vmatprep.subr.mxu0 0.0
    %507 = vmatpush2.msra.mxu0 0.0
    %508 = vmatprep.subr.mxu0 0.0
    %509 = vmatpush2.msra.mxu0 0.0
    %510 = vmatprep.subr.mxu0 0.0
    %511 = vmatpush2.msra.mxu0 0.0
    %512 = vmatprep.subr.mxu0 0.0
    %513 = vmatpush2.msra.mxu0 0.0
    %514 = vmatprep.subr.mxu0 0.0
    %515 = vmatpush2.msra.mxu0 0.0
    %516 = vmatprep.subr.mxu0 0.0
    %517 = vmatpush2.msra.mxu0 0.0
    %518 = vmatprep.mubr.f32.mxu0 0.0
    %v519 = vand.u32 %v113, 4294901760
    %520 = vmatmul.mubr.f32.gmra.mxu0 %v519
    %v521 = vpop.f32.mrf.mxu0
    %v522 = vadd.f32 %v439, %v521
    %v523 = vpop.f32.mrf.mxu0
    %524 = vdwg.mxu0
    %525 = vmatprep.subr.mxu0 0.0
    %526 = vmatpush1.msra.mxu0 0.0
    %527 = vmatprep.subr.mxu0 0.0
    %528 = vmatpush1.msra.mxu0 0.0
    %529 = vmatprep.subr.mxu0 0.0
    %530 = vmatpush1.msra.mxu0 0.0
    %531 = vmatprep.subr.mxu0 0.0
    %532 = vmatpush1.msra.mxu0 0.0
    %533 = vmatprep.subr.mxu0 0.0
    %534 = vmatpush1.msra.mxu0 0.0
    %535 = vmatprep.subr.mxu0 0.0
    %536 = vmatpush1.msra.mxu0 0.0
    %537 = vmatprep.subr.mxu0 0.0
    %538 = vmatpush1.msra.mxu0 0.0
    %539 = vmatprep.subr.mxu0 0.0
    %540 = vmatpush1.msra.mxu0 0.0
    %541 = vmatprep.subr.mxu0 0.0
    %542 = vmatpush1.msra.mxu0 0.0
    %543 = vmatprep.subr.mxu0 0.0
    %544 = vmatpush1.msra.mxu0 0.0
    %545 = vmatprep.subr.mxu0 0.0
    %546 = vmatpush1.msra.mxu0 0.0
    %547 = vmatprep.subr.mxu0 0.0
    %548 = vmatpush1.msra.mxu0 0.0
    %549 = vmatprep.subr.mxu0 0.0
    %v550 = vand.u32 %v103, 4294901760
    %551 = vmatpush1.msra.mxu0 %v550
    %552 = vmatprep.subr.mxu0 0.0
    %v553 = vand.u32 %v102, 4294901760
    %554 = vmatpush1.msra.mxu0 %v553
    %555 = vmatprep.subr.mxu0 0.0
    %v556 = vand.u32 %v101, 4294901760
    %557 = vmatpush1.msra.mxu0 %v556
    %558 = vmatprep.subr.mxu0 0.0
    %v559 = vand.u32 %v100, 4294901760
    %560 = vmatpush1.msra.mxu0 %v559
    %561 = vmatprep.subr.mxu0 0.0
    %562 = vmatpush2.msra.mxu0 0.0
    %563 = vmatprep.subr.mxu0 0.0
    %564 = vmatpush2.msra.mxu0 0.0
    %565 = vmatprep.subr.mxu0 0.0
    %566 = vmatpush2.msra.mxu0 0.0
    %567 = vmatprep.subr.mxu0 0.0
    %568 = vmatpush2.msra.mxu0 0.0
    %569 = vmatprep.subr.mxu0 0.0
    %570 = vmatpush2.msra.mxu0 0.0
    %571 = vmatprep.subr.mxu0 0.0
    %572 = vmatpush2.msra.mxu0 0.0
    %573 = vmatprep.subr.mxu0 0.0
    %574 = vmatpush2.msra.mxu0 0.0
    %575 = vmatprep.subr.mxu0 0.0
    %576 = vmatpush2.msra.mxu0 0.0
    %577 = vmatprep.subr.mxu0 0.0
    %578 = vmatpush2.msra.mxu0 0.0
    %579 = vmatprep.subr.mxu0 0.0
    %580 = vmatpush2.msra.mxu0 0.0
    %581 = vmatprep.subr.mxu0 0.0
    %582 = vmatpush2.msra.mxu0 0.0
    %583 = vmatprep.subr.mxu0 0.0
    %584 = vmatpush2.msra.mxu0 0.0
    %585 = vmatprep.subr.mxu0 0.0
    %586 = vmatpush2.msra.mxu0 0.0
    %587 = vmatprep.subr.mxu0 0.0
    %588 = vmatpush2.msra.mxu0 0.0
    %589 = vmatprep.subr.mxu0 0.0
    %590 = vmatpush2.msra.mxu0 0.0
    %591 = vmatprep.subr.mxu0 0.0
    %592 = vmatpush2.msra.mxu0 0.0
    %593 = vmatprep.mubr.f32.mxu0 0.0
    %v594 = vand.u32 %v113, 4294901760
    %595 = vmatmul.mubr.f32.gmra.mxu0 %v594
    %v596 = vpop.f32.mrf.mxu0
    %v597 = vadd.f32 %v522, %v596
    %v598 = vpop.f32.mrf.mxu0
    %599 = vdwg.mxu0
    %vm600 = vcmp.gt.f32.partialorder %v597, 0.0
    %v601 = vmul.f32 %v597, 0.2
    %v602 = vsel %vm600, %v597, %v601
    %v603 = vld [vmem:[#allocation7] sm:$0xff]
    %v604 = vld [vmem:[#allocation7 + $0x8] sm:$0xff]
    %v605 = vld [vmem:[#allocation7 + $0x10] sm:$0xff]
    %v606 = vld [vmem:[#allocation7 + $0x18] sm:$0xff]
    %v607 = vld [vmem:[#allocation7 + $0x20] sm:$0xff]
    %v608 = vld [vmem:[#allocation7 + $0x28] sm:$0xff]
    %v609 = vld [vmem:[#allocation7 + $0x30] sm:$0xff]
    %v610 = vld [vmem:[#allocation7 + $0x38] sm:$0xff]
    %v611 = vld [vmem:[#allocation7 + $0x40] sm:$0xff]
    %v612 = vld [vmem:[#allocation7 + $0x48] sm:$0xff]
    %v613 = vld [vmem:[#allocation7 + $0x50] sm:$0xff]
    %v614 = vld [vmem:[#allocation7 + $0x58] sm:$0xff]
    %v615 = vld [vmem:[#allocation7 + $0x60] sm:$0xff]
    %v616 = vld [vmem:[#allocation7 + $0x68] sm:$0xff]
    %v617 = vld [vmem:[#allocation7 + $0x70] sm:$0xff]
    %v618 = vld [vmem:[#allocation7 + $0x78] sm:$0xff]
    %v619 = vld [vmem:[%s4] sm:$0x1]
    %v621 = vlaneseq
    %v622 = vshrl.u32 %v621, 7
    %v623 = vsub.s32 0, %v622
    %v624 = vrot.slane %v619, %v623
    %626 = vmatprep.subr.mxu0 0.0
    %v627 = vand.u32 %v618, 4294901760
    %628 = vmatpush1.msra.mxu0 %v627
    %629 = vmatprep.subr.mxu0 0.0
    %v630 = vand.u32 %v617, 4294901760
    %631 = vmatpush1.msra.mxu0 %v630
    %632 = vmatprep.subr.mxu0 0.0
    %v633 = vand.u32 %v616, 4294901760
    %634 = vmatpush1.msra.mxu0 %v633
    %635 = vmatprep.subr.mxu0 0.0
    %v636 = vand.u32 %v615, 4294901760
    %637 = vmatpush1.msra.mxu0 %v636
    %638 = vmatprep.subr.mxu0 0.0
    %v639 = vand.u32 %v614, 4294901760
    %640 = vmatpush1.msra.mxu0 %v639
    %641 = vmatprep.subr.mxu0 0.0
    %v642 = vand.u32 %v613, 4294901760
    %643 = vmatpush1.msra.mxu0 %v642
    %644 = vmatprep.subr.mxu0 0.0
    %v645 = vand.u32 %v612, 4294901760
    %646 = vmatpush1.msra.mxu0 %v645
    %647 = vmatprep.subr.mxu0 0.0
    %v648 = vand.u32 %v611, 4294901760
    %649 = vmatpush1.msra.mxu0 %v648
    %650 = vmatprep.subr.mxu0 0.0
    %v651 = vand.u32 %v610, 4294901760
    %652 = vmatpush1.msra.mxu0 %v651
    %653 = vmatprep.subr.mxu0 0.0
    %v654 = vand.u32 %v609, 4294901760
    %655 = vmatpush1.msra.mxu0 %v654
    %656 = vmatprep.subr.mxu0 0.0
    %v657 = vand.u32 %v608, 4294901760
    %658 = vmatpush1.msra.mxu0 %v657
    %659 = vmatprep.subr.mxu0 0.0
    %v660 = vand.u32 %v607, 4294901760
    %661 = vmatpush1.msra.mxu0 %v660
    %662 = vmatprep.subr.mxu0 0.0
    %v663 = vand.u32 %v606, 4294901760
    %664 = vmatpush1.msra.mxu0 %v663
    %665 = vmatprep.subr.mxu0 0.0
    %v666 = vand.u32 %v605, 4294901760
    %667 = vmatpush1.msra.mxu0 %v666
    %668 = vmatprep.subr.mxu0 0.0
    %v669 = vand.u32 %v604, 4294901760
    %670 = vmatpush1.msra.mxu0 %v669
    %671 = vmatprep.subr.mxu0 0.0
    %v672 = vand.u32 %v603, 4294901760
    %673 = vmatpush1.msra.mxu0 %v672
    %674 = vmatprep.subr.mxu0 0.0
    %675 = vmatpush2.msra.mxu0 0.0
    %676 = vmatprep.subr.mxu0 0.0
    %677 = vmatpush2.msra.mxu0 0.0
    %678 = vmatprep.subr.mxu0 0.0
    %679 = vmatpush2.msra.mxu0 0.0
    %680 = vmatprep.subr.mxu0 0.0
    %681 = vmatpush2.msra.mxu0 0.0
    %682 = vmatprep.subr.mxu0 0.0
    %683 = vmatpush2.msra.mxu0 0.0
    %684 = vmatprep.subr.mxu0 0.0
    %685 = vmatpush2.msra.mxu0 0.0
    %686 = vmatprep.subr.mxu0 0.0
    %687 = vmatpush2.msra.mxu0 0.0
    %688 = vmatprep.subr.mxu0 0.0
    %689 = vmatpush2.msra.mxu0 0.0
    %690 = vmatprep.subr.mxu0 0.0
    %691 = vmatpush2.msra.mxu0 0.0
    %692 = vmatprep.subr.mxu0 0.0
    %693 = vmatpush2.msra.mxu0 0.0
    %694 = vmatprep.subr.mxu0 0.0
    %695 = vmatpush2.msra.mxu0 0.0
    %696 = vmatprep.subr.mxu0 0.0
    %697 = vmatpush2.msra.mxu0 0.0
    %698 = vmatprep.subr.mxu0 0.0
    %699 = vmatpush2.msra.mxu0 0.0
    %700 = vmatprep.subr.mxu0 0.0
    %701 = vmatpush2.msra.mxu0 0.0
    %702 = vmatprep.subr.mxu0 0.0
    %703 = vmatpush2.msra.mxu0 0.0
    %704 = vmatprep.subr.mxu0 0.0
    %705 = vmatpush2.msra.mxu0 0.0
    %706 = vmatprep.mubr.f32.mxu0 0.0
    %v707 = vand.u32 %v602, 4294901760
    %v708 = vsub.f32 %v602, %v707
    %v709 = vand.u32 %v708, 4294901760
    %v710 = vsub.f32 %v708, %v709
    %v711 = vand.u32 %v710, 4294901760
    %712 = vmatmul.mubr.f32.gmra.mxu0 %v711
    %v713 = vpop.f32.mrf.mxu0
    %v714 = vadd.f32 %v624, %v713
    %v715 = vpop.f32.mrf.mxu0
    %716 = vdwg.mxu0
    %717 = vmatprep.subr.mxu0 0.0
    %v718 = vand.u32 %v618, 4294901760
    %v719 = vsub.f32 %v618, %v718
    %v720 = vand.u32 %v719, 4294901760
    %v721 = vsub.f32 %v719, %v720
    %v722 = vand.u32 %v721, 4294901760
    %723 = vmatpush1.msra.mxu0 %v722
    %724 = vmatprep.subr.mxu0 0.0
    %v725 = vand.u32 %v617, 4294901760
    %v726 = vsub.f32 %v617, %v725
    %v727 = vand.u32 %v726, 4294901760
    %v728 = vsub.f32 %v726, %v727
    %v729 = vand.u32 %v728, 4294901760
    %730 = vmatpush1.msra.mxu0 %v729
    %731 = vmatprep.subr.mxu0 0.0
    %v732 = vand.u32 %v616, 4294901760
    %v733 = vsub.f32 %v616, %v732
    %v734 = vand.u32 %v733, 4294901760
    %v735 = vsub.f32 %v733, %v734
    %v736 = vand.u32 %v735, 4294901760
    %737 = vmatpush1.msra.mxu0 %v736
    %738 = vmatprep.subr.mxu0 0.0
    %v739 = vand.u32 %v615, 4294901760
    %v740 = vsub.f32 %v615, %v739
    %v741 = vand.u32 %v740, 4294901760
    %v742 = vsub.f32 %v740, %v741
    %v743 = vand.u32 %v742, 4294901760
    %744 = vmatpush1.msra.mxu0 %v743
    %745 = vmatprep.subr.mxu0 0.0
    %v746 = vand.u32 %v614, 4294901760
    %v747 = vsub.f32 %v614, %v746
    %v748 = vand.u32 %v747, 4294901760
    %v749 = vsub.f32 %v747, %v748
    %v750 = vand.u32 %v749, 4294901760
    %751 = vmatpush1.msra.mxu0 %v750
    %752 = vmatprep.subr.mxu0 0.0
    %v753 = vand.u32 %v613, 4294901760
    %v754 = vsub.f32 %v613, %v753
    %v755 = vand.u32 %v754, 4294901760
    %v756 = vsub.f32 %v754, %v755
    %v757 = vand.u32 %v756, 4294901760
    %758 = vmatpush1.msra.mxu0 %v757
    %759 = vmatprep.subr.mxu0 0.0
    %v760 = vand.u32 %v612, 4294901760
    %v761 = vsub.f32 %v612, %v760
    %v762 = vand.u32 %v761, 4294901760
    %v763 = vsub.f32 %v761, %v762
    %v764 = vand.u32 %v763, 4294901760
    %765 = vmatpush1.msra.mxu0 %v764
    %766 = vmatprep.subr.mxu0 0.0
    %v767 = vand.u32 %v611, 4294901760
    %v768 = vsub.f32 %v611, %v767
    %v769 = vand.u32 %v768, 4294901760
    %v770 = vsub.f32 %v768, %v769
    %v771 = vand.u32 %v770, 4294901760
    %772 = vmatpush1.msra.mxu0 %v771
    %773 = vmatprep.subr.mxu0 0.0
    %v774 = vand.u32 %v610, 4294901760
    %v775 = vsub.f32 %v610, %v774
    %v776 = vand.u32 %v775, 4294901760
    %v777 = vsub.f32 %v775, %v776
    %v778 = vand.u32 %v777, 4294901760
    %779 = vmatpush1.msra.mxu0 %v778
    %780 = vmatprep.subr.mxu0 0.0
    %v781 = vand.u32 %v609, 4294901760
    %v782 = vsub.f32 %v609, %v781
    %v783 = vand.u32 %v782, 4294901760
    %v784 = vsub.f32 %v782, %v783
    %v785 = vand.u32 %v784, 4294901760
    %786 = vmatpush1.msra.mxu0 %v785
    %787 = vmatprep.subr.mxu0 0.0
    %v788 = vand.u32 %v608, 4294901760
    %v789 = vsub.f32 %v608, %v788
    %v790 = vand.u32 %v789, 4294901760
    %v791 = vsub.f32 %v789, %v790
    %v792 = vand.u32 %v791, 4294901760
    %793 = vmatpush1.msra.mxu0 %v792
    %794 = vmatprep.subr.mxu0 0.0
    %v795 = vand.u32 %v607, 4294901760
    %v796 = vsub.f32 %v607, %v795
    %v797 = vand.u32 %v796, 4294901760
    %v798 = vsub.f32 %v796, %v797
    %v799 = vand.u32 %v798, 4294901760
    %800 = vmatpush1.msra.mxu0 %v799
    %801 = vmatprep.subr.mxu0 0.0
    %v802 = vand.u32 %v606, 4294901760
    %v803 = vsub.f32 %v606, %v802
    %v804 = vand.u32 %v803, 4294901760
    %v805 = vsub.f32 %v803, %v804
    %v806 = vand.u32 %v805, 4294901760
    %807 = vmatpush1.msra.mxu0 %v806
    %808 = vmatprep.subr.mxu0 0.0
    %v809 = vand.u32 %v605, 4294901760
    %v810 = vsub.f32 %v605, %v809
    %v811 = vand.u32 %v810, 4294901760
    %v812 = vsub.f32 %v810, %v811
    %v813 = vand.u32 %v812, 4294901760
    %814 = vmatpush1.msra.mxu0 %v813
    %815 = vmatprep.subr.mxu0 0.0
    %v816 = vand.u32 %v604, 4294901760
    %v817 = vsub.f32 %v604, %v816
    %v818 = vand.u32 %v817, 4294901760
    %v819 = vsub.f32 %v817, %v818
    %v820 = vand.u32 %v819, 4294901760
    %821 = vmatpush1.msra.mxu0 %v820
    %822 = vmatprep.subr.mxu0 0.0
    %v823 = vand.u32 %v603, 4294901760
    %v824 = vsub.f32 %v603, %v823
    %v825 = vand.u32 %v824, 4294901760
    %v826 = vsub.f32 %v824, %v825
    %v827 = vand.u32 %v826, 4294901760
    %828 = vmatpush1.msra.mxu0 %v827
    %829 = vmatprep.subr.mxu0 0.0
    %830 = vmatpush2.msra.mxu0 0.0
    %831 = vmatprep.subr.mxu0 0.0
    %832 = vmatpush2.msra.mxu0 0.0
    %833 = vmatprep.subr.mxu0 0.0
    %834 = vmatpush2.msra.mxu0 0.0
    %835 = vmatprep.subr.mxu0 0.0
    %836 = vmatpush2.msra.mxu0 0.0
    %837 = vmatprep.subr.mxu0 0.0
    %838 = vmatpush2.msra.mxu0 0.0
    %839 = vmatprep.subr.mxu0 0.0
    %840 = vmatpush2.msra.mxu0 0.0
    %841 = vmatprep.subr.mxu0 0.0
    %842 = vmatpush2.msra.mxu0 0.0
    %843 = vmatprep.subr.mxu0 0.0
    %844 = vmatpush2.msra.mxu0 0.0
    %845 = vmatprep.subr.mxu0 0.0
    %846 = vmatpush2.msra.mxu0 0.0
    %847 = vmatprep.subr.mxu0 0.0
    %848 = vmatpush2.msra.mxu0 0.0
    %849 = vmatprep.subr.mxu0 0.0
    %850 = vmatpush2.msra.mxu0 0.0
    %851 = vmatprep.subr.mxu0 0.0
    %852 = vmatpush2.msra.mxu0 0.0
    %853 = vmatprep.subr.mxu0 0.0
    %854 = vmatpush2.msra.mxu0 0.0
    %855 = vmatprep.subr.mxu0 0.0
    %856 = vmatpush2.msra.mxu0 0.0
    %857 = vmatprep.subr.mxu0 0.0
    %858 = vmatpush2.msra.mxu0 0.0
    %859 = vmatprep.subr.mxu0 0.0
    %860 = vmatpush2.msra.mxu0 0.0
    %861 = vmatprep.mubr.f32.mxu0 0.0
    %v862 = vand.u32 %v602, 4294901760
    %863 = vmatmul.mubr.f32.gmra.mxu0 %v862
    %v864 = vpop.f32.mrf.mxu0
    %v865 = vadd.f32 %v714, %v864
    %v866 = vpop.f32.mrf.mxu0
    %867 = vdwg.mxu0
    %868 = vmatprep.subr.mxu0 0.0
    %v869 = vand.u32 %v618, 4294901760
    %v870 = vsub.f32 %v618, %v869
    %871 = vmatpush1.msra.mxu0 %v870
    %872 = vmatprep.subr.mxu0 0.0
    %v873 = vand.u32 %v617, 4294901760
    %v874 = vsub.f32 %v617, %v873
    %875 = vmatpush1.msra.mxu0 %v874
    %876 = vmatprep.subr.mxu0 0.0
    %v877 = vand.u32 %v616, 4294901760
    %v878 = vsub.f32 %v616, %v877
    %879 = vmatpush1.msra.mxu0 %v878
    %880 = vmatprep.subr.mxu0 0.0
    %v881 = vand.u32 %v615, 4294901760
    %v882 = vsub.f32 %v615, %v881
    %883 = vmatpush1.msra.mxu0 %v882
    %884 = vmatprep.subr.mxu0 0.0
    %v885 = vand.u32 %v614, 4294901760
    %v886 = vsub.f32 %v614, %v885
    %887 = vmatpush1.msra.mxu0 %v886
    %888 = vmatprep.subr.mxu0 0.0
    %v889 = vand.u32 %v613, 4294901760
    %v890 = vsub.f32 %v613, %v889
    %891 = vmatpush1.msra.mxu0 %v890
    %892 = vmatprep.subr.mxu0 0.0
    %v893 = vand.u32 %v612, 4294901760
    %v894 = vsub.f32 %v612, %v893
    %895 = vmatpush1.msra.mxu0 %v894
    %896 = vmatprep.subr.mxu0 0.0
    %v897 = vand.u32 %v611, 4294901760
    %v898 = vsub.f32 %v611, %v897
    %899 = vmatpush1.msra.mxu0 %v898
    %900 = vmatprep.subr.mxu0 0.0
    %v901 = vand.u32 %v610, 4294901760
    %v902 = vsub.f32 %v610, %v901
    %903 = vmatpush1.msra.mxu0 %v902
    %904 = vmatprep.subr.mxu0 0.0
    %v905 = vand.u32 %v609, 4294901760
    %v906 = vsub.f32 %v609, %v905
    %907 = vmatpush1.msra.mxu0 %v906
    %908 = vmatprep.subr.mxu0 0.0
    %v909 = vand.u32 %v608, 4294901760
    %v910 = vsub.f32 %v608, %v909
    %911 = vmatpush1.msra.mxu0 %v910
    %912 = vmatprep.subr.mxu0 0.0
    %v913 = vand.u32 %v607, 4294901760
    %v914 = vsub.f32 %v607, %v913
    %915 = vmatpush1.msra.mxu0 %v914
    %916 = vmatprep.subr.mxu0 0.0
    %v917 = vand.u32 %v606, 4294901760
    %v918 = vsub.f32 %v606, %v917
    %919 = vmatpush1.msra.mxu0 %v918
    %920 = vmatprep.subr.mxu0 0.0
    %v921 = vand.u32 %v605, 4294901760
    %v922 = vsub.f32 %v605, %v921
    %923 = vmatpush1.msra.mxu0 %v922
    %924 = vmatprep.subr.mxu0 0.0
    %v925 = vand.u32 %v604, 4294901760
    %v926 = vsub.f32 %v604, %v925
    %927 = vmatpush1.msra.mxu0 %v926
    %928 = vmatprep.subr.mxu0 0.0
    %v929 = vand.u32 %v603, 4294901760
    %v930 = vsub.f32 %v603, %v929
    %931 = vmatpush1.msra.mxu0 %v930
    %932 = vmatprep.subr.mxu0 0.0
    %933 = vmatpush2.msra.mxu0 0.0
    %934 = vmatprep.subr.mxu0 0.0
    %935 = vmatpush2.msra.mxu0 0.0
    %936 = vmatprep.subr.mxu0 0.0
    %937 = vmatpush2.msra.mxu0 0.0
    %938 = vmatprep.subr.mxu0 0.0
    %939 = vmatpush2.msra.mxu0 0.0
    %940 = vmatprep.subr.mxu0 0.0
    %941 = vmatpush2.msra.mxu0 0.0
    %942 = vmatprep.subr.mxu0 0.0
    %943 = vmatpush2.msra.mxu0 0.0
    %944 = vmatprep.subr.mxu0 0.0
    %945 = vmatpush2.msra.mxu0 0.0
    %946 = vmatprep.subr.mxu0 0.0
    %947 = vmatpush2.msra.mxu0 0.0
    %948 = vmatprep.subr.mxu0 0.0
    %949 = vmatpush2.msra.mxu0 0.0
    %950 = vmatprep.subr.mxu0 0.0
    %951 = vmatpush2.msra.mxu0 0.0
    %952 = vmatprep.subr.mxu0 0.0
    %953 = vmatpush2.msra.mxu0 0.0
    %954 = vmatprep.subr.mxu0 0.0
    %955 = vmatpush2.msra.mxu0 0.0
    %956 = vmatprep.subr.mxu0 0.0
    %957 = vmatpush2.msra.mxu0 0.0
    %958 = vmatprep.subr.mxu0 0.0
    %959 = vmatpush2.msra.mxu0 0.0
    %960 = vmatprep.subr.mxu0 0.0
    %961 = vmatpush2.msra.mxu0 0.0
    %962 = vmatprep.subr.mxu0 0.0
    %963 = vmatpush2.msra.mxu0 0.0
    %964 = vmatprep.mubr.f32.mxu0 0.0
    %v965 = vand.u32 %v602, 4294901760
    %v966 = vsub.f32 %v602, %v965
    %967 = vmatmul.mubr.f32.gmra.mxu0 %v966
    %v968 = vpop.f32.mrf.mxu0
    %v969 = vadd.f32 %v865, %v968
    %v970 = vpop.f32.mrf.mxu0
    %971 = vdwg.mxu0
    %972 = vmatprep.subr.mxu0 0.0
    %v973 = vand.u32 %v618, 4294901760
    %974 = vmatpush1.msra.mxu0 %v973
    %975 = vmatprep.subr.mxu0 0.0
    %v976 = vand.u32 %v617, 4294901760
    %977 = vmatpush1.msra.mxu0 %v976
    %978 = vmatprep.subr.mxu0 0.0
    %v979 = vand.u32 %v616, 4294901760
    %980 = vmatpush1.msra.mxu0 %v979
    %981 = vmatprep.subr.mxu0 0.0
    %v982 = vand.u32 %v615, 4294901760
    %983 = vmatpush1.msra.mxu0 %v982
    %984 = vmatprep.subr.mxu0 0.0
    %v985 = vand.u32 %v614, 4294901760
    %986 = vmatpush1.msra.mxu0 %v985
    %987 = vmatprep.subr.mxu0 0.0
    %v988 = vand.u32 %v613, 4294901760
    %989 = vmatpush1.msra.mxu0 %v988
    %990 = vmatprep.subr.mxu0 0.0
    %v991 = vand.u32 %v612, 4294901760
    %992 = vmatpush1.msra.mxu0 %v991
    %993 = vmatprep.subr.mxu0 0.0
    %v994 = vand.u32 %v611, 4294901760
    %995 = vmatpush1.msra.mxu0 %v994
    %996 = vmatprep.subr.mxu0 0.0
    %v997 = vand.u32 %v610, 4294901760
    %998 = vmatpush1.msra.mxu0 %v997
    %999 = vmatprep.subr.mxu0 0.0
    %v1000 = vand.u32 %v609, 4294901760
    %1001 = vmatpush1.msra.mxu0 %v1000
    %1002 = vmatprep.subr.mxu0 0.0
    %v1003 = vand.u32 %v608, 4294901760
    %1004 = vmatpush1.msra.mxu0 %v1003
    %1005 = vmatprep.subr.mxu0 0.0
    %v1006 = vand.u32 %v607, 4294901760
    %1007 = vmatpush1.msra.mxu0 %v1006
    %1008 = vmatprep.subr.mxu0 0.0
    %v1009 = vand.u32 %v606, 4294901760
    %1010 = vmatpush1.msra.mxu0 %v1009
    %1011 = vmatprep.subr.mxu0 0.0
    %v1012 = vand.u32 %v605, 4294901760
    %1013 = vmatpush1.msra.mxu0 %v1012
    %1014 = vmatprep.subr.mxu0 0.0
    %v1015 = vand.u32 %v604, 4294901760
    %1016 = vmatpush1.msra.mxu0 %v1015
    %1017 = vmatprep.subr.mxu0 0.0
    %v1018 = vand.u32 %v603, 4294901760
    %1019 = vmatpush1.msra.mxu0 %v1018
    %1020 = vmatprep.subr.mxu0 0.0
    %1021 = vmatpush2.msra.mxu0 0.0
    %1022 = vmatprep.subr.mxu0 0.0
    %1023 = vmatpush2.msra.mxu0 0.0
    %1024 = vmatprep.subr.mxu0 0.0
    %1025 = vmatpush2.msra.mxu0 0.0
    %1026 = vmatprep.subr.mxu0 0.0
    %1027 = vmatpush2.msra.mxu0 0.0
    %1028 = vmatprep.subr.mxu0 0.0
    %1029 = vmatpush2.msra.mxu0 0.0
    %1030 = vmatprep.subr.mxu0 0.0
    %1031 = vmatpush2.msra.mxu0 0.0
    %1032 = vmatprep.subr.mxu0 0.0
    %1033 = vmatpush2.msra.mxu0 0.0
    %1034 = vmatprep.subr.mxu0 0.0
    %1035 = vmatpush2.msra.mxu0 0.0
    %1036 = vmatprep.subr.mxu0 0.0
    %1037 = vmatpush2.msra.mxu0 0.0
    %1038 = vmatprep.subr.mxu0 0.0
    %1039 = vmatpush2.msra.mxu0 0.0
    %1040 = vmatprep.subr.mxu0 0.0
    %1041 = vmatpush2.msra.mxu0 0.0
    %1042 = vmatprep.subr.mxu0 0.0
    %1043 = vmatpush2.msra.mxu0 0.0
    %1044 = vmatprep.subr.mxu0 0.0
    %1045 = vmatpush2.msra.mxu0 0.0
    %1046 = vmatprep.subr.mxu0 0.0
    %1047 = vmatpush2.msra.mxu0 0.0
    %1048 = vmatprep.subr.mxu0 0.0
    %1049 = vmatpush2.msra.mxu0 0.0
    %1050 = vmatprep.subr.mxu0 0.0
    %1051 = vmatpush2.msra.mxu0 0.0
    %1052 = vmatprep.mubr.f32.mxu0 0.0
    %v1053 = vand.u32 %v602, 4294901760
    %v1054 = vsub.f32 %v602, %v1053
    %v1055 = vand.u32 %v1054, 4294901760
    %1056 = vmatmul.mubr.f32.gmra.mxu0 %v1055
    %v1057 = vpop.f32.mrf.mxu0
    %v1058 = vadd.f32 %v969, %v1057
    %v1059 = vpop.f32.mrf.mxu0
    %1060 = vdwg.mxu0
    %1061 = vmatprep.subr.mxu0 0.0
    %v1062 = vand.u32 %v618, 4294901760
    %v1063 = vsub.f32 %v618, %v1062
    %v1064 = vand.u32 %v1063, 4294901760
    %1065 = vmatpush1.msra.mxu0 %v1064
    %1066 = vmatprep.subr.mxu0 0.0
    %v1067 = vand.u32 %v617, 4294901760
    %v1068 = vsub.f32 %v617, %v1067
    %v1069 = vand.u32 %v1068, 4294901760
    %1070 = vmatpush1.msra.mxu0 %v1069
    %1071 = vmatprep.subr.mxu0 0.0
    %v1072 = vand.u32 %v616, 4294901760
    %v1073 = vsub.f32 %v616, %v1072
    %v1074 = vand.u32 %v1073, 4294901760
    %1075 = vmatpush1.msra.mxu0 %v1074
    %1076 = vmatprep.subr.mxu0 0.0
    %v1077 = vand.u32 %v615, 4294901760
    %v1078 = vsub.f32 %v615, %v1077
    %v1079 = vand.u32 %v1078, 4294901760
    %1080 = vmatpush1.msra.mxu0 %v1079
    %1081 = vmatprep.subr.mxu0 0.0
    %v1082 = vand.u32 %v614, 4294901760
    %v1083 = vsub.f32 %v614, %v1082
    %v1084 = vand.u32 %v1083, 4294901760
    %1085 = vmatpush1.msra.mxu0 %v1084
    %1086 = vmatprep.subr.mxu0 0.0
    %v1087 = vand.u32 %v613, 4294901760
    %v1088 = vsub.f32 %v613, %v1087
    %v1089 = vand.u32 %v1088, 4294901760
    %1090 = vmatpush1.msra.mxu0 %v1089
    %1091 = vmatprep.subr.mxu0 0.0
    %v1092 = vand.u32 %v612, 4294901760
    %v1093 = vsub.f32 %v612, %v1092
    %v1094 = vand.u32 %v1093, 4294901760
    %1095 = vmatpush1.msra.mxu0 %v1094
    %1096 = vmatprep.subr.mxu0 0.0
    %v1097 = vand.u32 %v611, 4294901760
    %v1098 = vsub.f32 %v611, %v1097
    %v1099 = vand.u32 %v1098, 4294901760
    %1100 = vmatpush1.msra.mxu0 %v1099
    %1101 = vmatprep.subr.mxu0 0.0
    %v1102 = vand.u32 %v610, 4294901760
    %v1103 = vsub.f32 %v610, %v1102
    %v1104 = vand.u32 %v1103, 4294901760
    %1105 = vmatpush1.msra.mxu0 %v1104
    %1106 = vmatprep.subr.mxu0 0.0
    %v1107 = vand.u32 %v609, 4294901760
    %v1108 = vsub.f32 %v609, %v1107
    %v1109 = vand.u32 %v1108, 4294901760
    %1110 = vmatpush1.msra.mxu0 %v1109
    %1111 = vmatprep.subr.mxu0 0.0
    %v1112 = vand.u32 %v608, 4294901760
    %v1113 = vsub.f32 %v608, %v1112
    %v1114 = vand.u32 %v1113, 4294901760
    %1115 = vmatpush1.msra.mxu0 %v1114
    %1116 = vmatprep.subr.mxu0 0.0
    %v1117 = vand.u32 %v607, 4294901760
    %v1118 = vsub.f32 %v607, %v1117
    %v1119 = vand.u32 %v1118, 4294901760
    %1120 = vmatpush1.msra.mxu0 %v1119
    %1121 = vmatprep.subr.mxu0 0.0
    %v1122 = vand.u32 %v606, 4294901760
    %v1123 = vsub.f32 %v606, %v1122
    %v1124 = vand.u32 %v1123, 4294901760
    %1125 = vmatpush1.msra.mxu0 %v1124
    %1126 = vmatprep.subr.mxu0 0.0
    %v1127 = vand.u32 %v605, 4294901760
    %v1128 = vsub.f32 %v605, %v1127
    %v1129 = vand.u32 %v1128, 4294901760
    %1130 = vmatpush1.msra.mxu0 %v1129
    %1131 = vmatprep.subr.mxu0 0.0
    %v1132 = vand.u32 %v604, 4294901760
    %v1133 = vsub.f32 %v604, %v1132
    %v1134 = vand.u32 %v1133, 4294901760
    %1135 = vmatpush1.msra.mxu0 %v1134
    %1136 = vmatprep.subr.mxu0 0.0
    %v1137 = vand.u32 %v603, 4294901760
    %v1138 = vsub.f32 %v603, %v1137
    %v1139 = vand.u32 %v1138, 4294901760
    %1140 = vmatpush1.msra.mxu0 %v1139
    %1141 = vmatprep.subr.mxu0 0.0
    %1142 = vmatpush2.msra.mxu0 0.0
    %1143 = vmatprep.subr.mxu0 0.0
    %1144 = vmatpush2.msra.mxu0 0.0
    %1145 = vmatprep.subr.mxu0 0.0
    %1146 = vmatpush2.msra.mxu0 0.0
    %1147 = vmatprep.subr.mxu0 0.0
    %1148 = vmatpush2.msra.mxu0 0.0
    %1149 = vmatprep.subr.mxu0 0.0
    %1150 = vmatpush2.msra.mxu0 0.0
    %1151 = vmatprep.subr.mxu0 0.0
    %1152 = vmatpush2.msra.mxu0 0.0
    %1153 = vmatprep.subr.mxu0 0.0
    %1154 = vmatpush2.msra.mxu0 0.0
    %1155 = vmatprep.subr.mxu0 0.0
    %1156 = vmatpush2.msra.mxu0 0.0
    %1157 = vmatprep.subr.mxu0 0.0
    %1158 = vmatpush2.msra.mxu0 0.0
    %1159 = vmatprep.subr.mxu0 0.0
    %1160 = vmatpush2.msra.mxu0 0.0
    %1161 = vmatprep.subr.mxu0 0.0
    %1162 = vmatpush2.msra.mxu0 0.0
    %1163 = vmatprep.subr.mxu0 0.0
    %1164 = vmatpush2.msra.mxu0 0.0
    %1165 = vmatprep.subr.mxu0 0.0
    %1166 = vmatpush2.msra.mxu0 0.0
    %1167 = vmatprep.subr.mxu0 0.0
    %1168 = vmatpush2.msra.mxu0 0.0
    %1169 = vmatprep.subr.mxu0 0.0
    %1170 = vmatpush2.msra.mxu0 0.0
    %1171 = vmatprep.subr.mxu0 0.0
    %1172 = vmatpush2.msra.mxu0 0.0
    %1173 = vmatprep.mubr.f32.mxu0 0.0
    %v1174 = vand.u32 %v602, 4294901760
    %1175 = vmatmul.mubr.f32.gmra.mxu0 %v1174
    %v1176 = vpop.f32.mrf.mxu0
    %v1177 = vadd.f32 %v1058, %v1176
    %v1178 = vpop.f32.mrf.mxu0
    %1179 = vdwg.mxu0
    %1180 = vmatprep.subr.mxu0 0.0
    %v1181 = vand.u32 %v618, 4294901760
    %1182 = vmatpush1.msra.mxu0 %v1181
    %1183 = vmatprep.subr.mxu0 0.0
    %v1184 = vand.u32 %v617, 4294901760
    %1185 = vmatpush1.msra.mxu0 %v1184
    %1186 = vmatprep.subr.mxu0 0.0
    %v1187 = vand.u32 %v616, 4294901760
    %1188 = vmatpush1.msra.mxu0 %v1187
    %1189 = vmatprep.subr.mxu0 0.0
    %v1190 = vand.u32 %v615, 4294901760
    %1191 = vmatpush1.msra.mxu0 %v1190
    %1192 = vmatprep.subr.mxu0 0.0
    %v1193 = vand.u32 %v614, 4294901760
    %1194 = vmatpush1.msra.mxu0 %v1193
    %1195 = vmatprep.subr.mxu0 0.0
    %v1196 = vand.u32 %v613, 4294901760
    %1197 = vmatpush1.msra.mxu0 %v1196
    %1198 = vmatprep.subr.mxu0 0.0
    %v1199 = vand.u32 %v612, 4294901760
    %1200 = vmatpush1.msra.mxu0 %v1199
    %1201 = vmatprep.subr.mxu0 0.0
    %v1202 = vand.u32 %v611, 4294901760
    %1203 = vmatpush1.msra.mxu0 %v1202
    %1204 = vmatprep.subr.mxu0 0.0
    %v1205 = vand.u32 %v610, 4294901760
    %1206 = vmatpush1.msra.mxu0 %v1205
    %1207 = vmatprep.subr.mxu0 0.0
    %v1208 = vand.u32 %v609, 4294901760
    %1209 = vmatpush1.msra.mxu0 %v1208
    %1210 = vmatprep.subr.mxu0 0.0
    %v1211 = vand.u32 %v608, 4294901760
    %1212 = vmatpush1.msra.mxu0 %v1211
    %1213 = vmatprep.subr.mxu0 0.0
    %v1214 = vand.u32 %v607, 4294901760
    %1215 = vmatpush1.msra.mxu0 %v1214
    %1216 = vmatprep.subr.mxu0 0.0
    %v1217 = vand.u32 %v606, 4294901760
    %1218 = vmatpush1.msra.mxu0 %v1217
    %1219 = vmatprep.subr.mxu0 0.0
    %v1220 = vand.u32 %v605, 4294901760
    %1221 = vmatpush1.msra.mxu0 %v1220
    %1222 = vmatprep.subr.mxu0 0.0
    %v1223 = vand.u32 %v604, 4294901760
    %1224 = vmatpush1.msra.mxu0 %v1223
    %1225 = vmatprep.subr.mxu0 0.0
    %v1226 = vand.u32 %v603, 4294901760
    %1227 = vmatpush1.msra.mxu0 %v1226
    %1228 = vmatprep.subr.mxu0 0.0
    %1229 = vmatpush2.msra.mxu0 0.0
    %1230 = vmatprep.subr.mxu0 0.0
    %1231 = vmatpush2.msra.mxu0 0.0
    %1232 = vmatprep.subr.mxu0 0.0
    %1233 = vmatpush2.msra.mxu0 0.0
    %1234 = vmatprep.subr.mxu0 0.0
    %1235 = vmatpush2.msra.mxu0 0.0
    %1236 = vmatprep.subr.mxu0 0.0
    %1237 = vmatpush2.msra.mxu0 0.0
    %1238 = vmatprep.subr.mxu0 0.0
    %1239 = vmatpush2.msra.mxu0 0.0
    %1240 = vmatprep.subr.mxu0 0.0
    %1241 = vmatpush2.msra.mxu0 0.0
    %1242 = vmatprep.subr.mxu0 0.0
    %1243 = vmatpush2.msra.mxu0 0.0
    %1244 = vmatprep.subr.mxu0 0.0
    %1245 = vmatpush2.msra.mxu0 0.0
    %1246 = vmatprep.subr.mxu0 0.0
    %1247 = vmatpush2.msra.mxu0 0.0
    %1248 = vmatprep.subr.mxu0 0.0
    %1249 = vmatpush2.msra.mxu0 0.0
    %1250 = vmatprep.subr.mxu0 0.0
    %1251 = vmatpush2.msra.mxu0 0.0
    %1252 = vmatprep.subr.mxu0 0.0
    %1253 = vmatpush2.msra.mxu0 0.0
    %1254 = vmatprep.subr.mxu0 0.0
    %1255 = vmatpush2.msra.mxu0 0.0
    %1256 = vmatprep.subr.mxu0 0.0
    %1257 = vmatpush2.msra.mxu0 0.0
    %1258 = vmatprep.subr.mxu0 0.0
    %1259 = vmatpush2.msra.mxu0 0.0
    %1260 = vmatprep.mubr.f32.mxu0 0.0
    %v1261 = vand.u32 %v602, 4294901760
    %1262 = vmatmul.mubr.f32.gmra.mxu0 %v1261
    %v1263 = vpop.f32.mrf.mxu0
    %v1264 = vadd.f32 %v1177, %v1263
    %v1265 = vpop.f32.mrf.mxu0
    %1266 = vdwg.mxu0
    %vm1267 = vcmp.gt.f32.partialorder %v1264, 0.0
    %v1268 = vmul.f32 %v1264, 0.2
    %v1269 = vsel %vm1267, %v1264, %v1268
    %v1270 = vld [vmem:[#allocation8] sm:$0xff]
    %v1271 = vld [vmem:[#allocation8 + $0x8] sm:$0xff]
    %v1272 = vld [vmem:[#allocation8 + $0x10] sm:$0xff]
    %v1273 = vld [vmem:[#allocation8 + $0x18] sm:$0xff]
    %v1274 = vld [vmem:[#allocation8 + $0x20] sm:$0xff]
    %v1275 = vld [vmem:[#allocation8 + $0x28] sm:$0xff]
    %v1276 = vld [vmem:[#allocation8 + $0x30] sm:$0xff]
    %v1277 = vld [vmem:[#allocation8 + $0x38] sm:$0xff]
    %v1278 = vld [vmem:[#allocation8 + $0x40] sm:$0xff]
    %v1279 = vld [vmem:[#allocation8 + $0x48] sm:$0xff]
    %v1280 = vld [vmem:[#allocation8 + $0x50] sm:$0xff]
    %v1281 = vld [vmem:[#allocation8 + $0x58] sm:$0xff]
    %v1282 = vld [vmem:[#allocation8 + $0x60] sm:$0xff]
    %v1283 = vld [vmem:[#allocation8 + $0x68] sm:$0xff]
    %v1284 = vld [vmem:[#allocation8 + $0x70] sm:$0xff]
    %v1285 = vld [vmem:[#allocation8 + $0x78] sm:$0xff]
    %v1286 = vld [vmem:[%s6] sm:$0x1]
    %v1288 = vlaneseq
    %v1289 = vshrl.u32 %v1288, 7
    %v1290 = vsub.s32 0, %v1289
    %v1291 = vrot.slane %v1286, %v1290
    %1293 = vmatprep.subr.mxu0 0.0
    %v1294 = vand.u32 %v1285, 4294901760
    %1295 = vmatpush1.msra.mxu0 %v1294
    %1296 = vmatprep.subr.mxu0 0.0
    %v1297 = vand.u32 %v1284, 4294901760
    %1298 = vmatpush1.msra.mxu0 %v1297
    %1299 = vmatprep.subr.mxu0 0.0
    %v1300 = vand.u32 %v1283, 4294901760
    %1301 = vmatpush1.msra.mxu0 %v1300
    %1302 = vmatprep.subr.mxu0 0.0
    %v1303 = vand.u32 %v1282, 4294901760
    %1304 = vmatpush1.msra.mxu0 %v1303
    %1305 = vmatprep.subr.mxu0 0.0
    %v1306 = vand.u32 %v1281, 4294901760
    %1307 = vmatpush1.msra.mxu0 %v1306
    %1308 = vmatprep.subr.mxu0 0.0
    %v1309 = vand.u32 %v1280, 4294901760
    %1310 = vmatpush1.msra.mxu0 %v1309
    %1311 = vmatprep.subr.mxu0 0.0
    %v1312 = vand.u32 %v1279, 4294901760
    %1313 = vmatpush1.msra.mxu0 %v1312
    %1314 = vmatprep.subr.mxu0 0.0
    %v1315 = vand.u32 %v1278, 4294901760
    %1316 = vmatpush1.msra.mxu0 %v1315
    %1317 = vmatprep.subr.mxu0 0.0
    %v1318 = vand.u32 %v1277, 4294901760
    %1319 = vmatpush1.msra.mxu0 %v1318
    %1320 = vmatprep.subr.mxu0 0.0
    %v1321 = vand.u32 %v1276, 4294901760
    %1322 = vmatpush1.msra.mxu0 %v1321
    %1323 = vmatprep.subr.mxu0 0.0
    %v1324 = vand.u32 %v1275, 4294901760
    %1325 = vmatpush1.msra.mxu0 %v1324
    %1326 = vmatprep.subr.mxu0 0.0
    %v1327 = vand.u32 %v1274, 4294901760
    %1328 = vmatpush1.msra.mxu0 %v1327
    %1329 = vmatprep.subr.mxu0 0.0
    %v1330 = vand.u32 %v1273, 4294901760
    %1331 = vmatpush1.msra.mxu0 %v1330
    %1332 = vmatprep.subr.mxu0 0.0
    %v1333 = vand.u32 %v1272, 4294901760
    %1334 = vmatpush1.msra.mxu0 %v1333
    %1335 = vmatprep.subr.mxu0 0.0
    %v1336 = vand.u32 %v1271, 4294901760
    %1337 = vmatpush1.msra.mxu0 %v1336
    %1338 = vmatprep.subr.mxu0 0.0
    %v1339 = vand.u32 %v1270, 4294901760
    %1340 = vmatpush1.msra.mxu0 %v1339
    %1341 = vmatprep.subr.mxu0 0.0
    %1342 = vmatpush2.msra.mxu0 0.0
    %1343 = vmatprep.subr.mxu0 0.0
    %1344 = vmatpush2.msra.mxu0 0.0
    %1345 = vmatprep.subr.mxu0 0.0
    %1346 = vmatpush2.msra.mxu0 0.0
    %1347 = vmatprep.subr.mxu0 0.0
    %1348 = vmatpush2.msra.mxu0 0.0
    %1349 = vmatprep.subr.mxu0 0.0
    %1350 = vmatpush2.msra.mxu0 0.0
    %1351 = vmatprep.subr.mxu0 0.0
    %1352 = vmatpush2.msra.mxu0 0.0
    %1353 = vmatprep.subr.mxu0 0.0
    %1354 = vmatpush2.msra.mxu0 0.0
    %1355 = vmatprep.subr.mxu0 0.0
    %1356 = vmatpush2.msra.mxu0 0.0
    %1357 = vmatprep.subr.mxu0 0.0
    %1358 = vmatpush2.msra.mxu0 0.0
    %1359 = vmatprep.subr.mxu0 0.0
    %1360 = vmatpush2.msra.mxu0 0.0
    %1361 = vmatprep.subr.mxu0 0.0
    %1362 = vmatpush2.msra.mxu0 0.0
    %1363 = vmatprep.subr.mxu0 0.0
    %1364 = vmatpush2.msra.mxu0 0.0
    %1365 = vmatprep.subr.mxu0 0.0
    %1366 = vmatpush2.msra.mxu0 0.0
    %1367 = vmatprep.subr.mxu0 0.0
    %1368 = vmatpush2.msra.mxu0 0.0
    %1369 = vmatprep.subr.mxu0 0.0
    %1370 = vmatpush2.msra.mxu0 0.0
    %1371 = vmatprep.subr.mxu0 0.0
    %1372 = vmatpush2.msra.mxu0 0.0
    %1373 = vmatprep.mubr.f32.mxu0 0.0
    %v1374 = vand.u32 %v1269, 4294901760
    %v1375 = vsub.f32 %v1269, %v1374
    %v1376 = vand.u32 %v1375, 4294901760
    %v1377 = vsub.f32 %v1375, %v1376
    %v1378 = vand.u32 %v1377, 4294901760
    %1379 = vmatmul.mubr.f32.gmra.mxu0 %v1378
    %v1380 = vpop.f32.mrf.mxu0
    %v1381 = vadd.f32 %v1291, %v1380
    %v1382 = vpop.f32.mrf.mxu0
    %1383 = vdwg.mxu0
    %1384 = vmatprep.subr.mxu0 0.0
    %v1385 = vand.u32 %v1285, 4294901760
    %v1386 = vsub.f32 %v1285, %v1385
    %v1387 = vand.u32 %v1386, 4294901760
    %v1388 = vsub.f32 %v1386, %v1387
    %v1389 = vand.u32 %v1388, 4294901760
    %1390 = vmatpush1.msra.mxu0 %v1389
    %1391 = vmatprep.subr.mxu0 0.0
    %v1392 = vand.u32 %v1284, 4294901760
    %v1393 = vsub.f32 %v1284, %v1392
    %v1394 = vand.u32 %v1393, 4294901760
    %v1395 = vsub.f32 %v1393, %v1394
    %v1396 = vand.u32 %v1395, 4294901760
    %1397 = vmatpush1.msra.mxu0 %v1396
    %1398 = vmatprep.subr.mxu0 0.0
    %v1399 = vand.u32 %v1283, 4294901760
    %v1400 = vsub.f32 %v1283, %v1399
    %v1401 = vand.u32 %v1400, 4294901760
    %v1402 = vsub.f32 %v1400, %v1401
    %v1403 = vand.u32 %v1402, 4294901760
    %1404 = vmatpush1.msra.mxu0 %v1403
    %1405 = vmatprep.subr.mxu0 0.0
    %v1406 = vand.u32 %v1282, 4294901760
    %v1407 = vsub.f32 %v1282, %v1406
    %v1408 = vand.u32 %v1407, 4294901760
    %v1409 = vsub.f32 %v1407, %v1408
    %v1410 = vand.u32 %v1409, 4294901760
    %1411 = vmatpush1.msra.mxu0 %v1410
    %1412 = vmatprep.subr.mxu0 0.0
    %v1413 = vand.u32 %v1281, 4294901760
    %v1414 = vsub.f32 %v1281, %v1413
    %v1415 = vand.u32 %v1414, 4294901760
    %v1416 = vsub.f32 %v1414, %v1415
    %v1417 = vand.u32 %v1416, 4294901760
    %1418 = vmatpush1.msra.mxu0 %v1417
    %1419 = vmatprep.subr.mxu0 0.0
    %v1420 = vand.u32 %v1280, 4294901760
    %v1421 = vsub.f32 %v1280, %v1420
    %v1422 = vand.u32 %v1421, 4294901760
    %v1423 = vsub.f32 %v1421, %v1422
    %v1424 = vand.u32 %v1423, 4294901760
    %1425 = vmatpush1.msra.mxu0 %v1424
    %1426 = vmatprep.subr.mxu0 0.0
    %v1427 = vand.u32 %v1279, 4294901760
    %v1428 = vsub.f32 %v1279, %v1427
    %v1429 = vand.u32 %v1428, 4294901760
    %v1430 = vsub.f32 %v1428, %v1429
    %v1431 = vand.u32 %v1430, 4294901760
    %1432 = vmatpush1.msra.mxu0 %v1431
    %1433 = vmatprep.subr.mxu0 0.0
    %v1434 = vand.u32 %v1278, 4294901760
    %v1435 = vsub.f32 %v1278, %v1434
    %v1436 = vand.u32 %v1435, 4294901760
    %v1437 = vsub.f32 %v1435, %v1436
    %v1438 = vand.u32 %v1437, 4294901760
    %1439 = vmatpush1.msra.mxu0 %v1438
    %1440 = vmatprep.subr.mxu0 0.0
    %v1441 = vand.u32 %v1277, 4294901760
    %v1442 = vsub.f32 %v1277, %v1441
    %v1443 = vand.u32 %v1442, 4294901760
    %v1444 = vsub.f32 %v1442, %v1443
    %v1445 = vand.u32 %v1444, 4294901760
    %1446 = vmatpush1.msra.mxu0 %v1445
    %1447 = vmatprep.subr.mxu0 0.0
    %v1448 = vand.u32 %v1276, 4294901760
    %v1449 = vsub.f32 %v1276, %v1448
    %v1450 = vand.u32 %v1449, 4294901760
    %v1451 = vsub.f32 %v1449, %v1450
    %v1452 = vand.u32 %v1451, 4294901760
    %1453 = vmatpush1.msra.mxu0 %v1452
    %1454 = vmatprep.subr.mxu0 0.0
    %v1455 = vand.u32 %v1275, 4294901760
    %v1456 = vsub.f32 %v1275, %v1455
    %v1457 = vand.u32 %v1456, 4294901760
    %v1458 = vsub.f32 %v1456, %v1457
    %v1459 = vand.u32 %v1458, 4294901760
    %1460 = vmatpush1.msra.mxu0 %v1459
    %1461 = vmatprep.subr.mxu0 0.0
    %v1462 = vand.u32 %v1274, 4294901760
    %v1463 = vsub.f32 %v1274, %v1462
    %v1464 = vand.u32 %v1463, 4294901760
    %v1465 = vsub.f32 %v1463, %v1464
    %v1466 = vand.u32 %v1465, 4294901760
    %1467 = vmatpush1.msra.mxu0 %v1466
    %1468 = vmatprep.subr.mxu0 0.0
    %v1469 = vand.u32 %v1273, 4294901760
    %v1470 = vsub.f32 %v1273, %v1469
    %v1471 = vand.u32 %v1470, 4294901760
    %v1472 = vsub.f32 %v1470, %v1471
    %v1473 = vand.u32 %v1472, 4294901760
    %1474 = vmatpush1.msra.mxu0 %v1473
    %1475 = vmatprep.subr.mxu0 0.0
    %v1476 = vand.u32 %v1272, 4294901760
    %v1477 = vsub.f32 %v1272, %v1476
    %v1478 = vand.u32 %v1477, 4294901760
    %v1479 = vsub.f32 %v1477, %v1478
    %v1480 = vand.u32 %v1479, 4294901760
    %1481 = vmatpush1.msra.mxu0 %v1480
    %1482 = vmatprep.subr.mxu0 0.0
    %v1483 = vand.u32 %v1271, 4294901760
    %v1484 = vsub.f32 %v1271, %v1483
    %v1485 = vand.u32 %v1484, 4294901760
    %v1486 = vsub.f32 %v1484, %v1485
    %v1487 = vand.u32 %v1486, 4294901760
    %1488 = vmatpush1.msra.mxu0 %v1487
    %1489 = vmatprep.subr.mxu0 0.0
    %v1490 = vand.u32 %v1270, 4294901760
    %v1491 = vsub.f32 %v1270, %v1490
    %v1492 = vand.u32 %v1491, 4294901760
    %v1493 = vsub.f32 %v1491, %v1492
    %v1494 = vand.u32 %v1493, 4294901760
    %1495 = vmatpush1.msra.mxu0 %v1494
    %1496 = vmatprep.subr.mxu0 0.0
    %1497 = vmatpush2.msra.mxu0 0.0
    %1498 = vmatprep.subr.mxu0 0.0
    %1499 = vmatpush2.msra.mxu0 0.0
    %1500 = vmatprep.subr.mxu0 0.0
    %1501 = vmatpush2.msra.mxu0 0.0
    %1502 = vmatprep.subr.mxu0 0.0
    %1503 = vmatpush2.msra.mxu0 0.0
    %1504 = vmatprep.subr.mxu0 0.0
    %1505 = vmatpush2.msra.mxu0 0.0
    %1506 = vmatprep.subr.mxu0 0.0
    %1507 = vmatpush2.msra.mxu0 0.0
    %1508 = vmatprep.subr.mxu0 0.0
    %1509 = vmatpush2.msra.mxu0 0.0
    %1510 = vmatprep.subr.mxu0 0.0
    %1511 = vmatpush2.msra.mxu0 0.0
    %1512 = vmatprep.subr.mxu0 0.0
    %1513 = vmatpush2.msra.mxu0 0.0
    %1514 = vmatprep.subr.mxu0 0.0
    %1515 = vmatpush2.msra.mxu0 0.0
    %1516 = vmatprep.subr.mxu0 0.0
    %1517 = vmatpush2.msra.mxu0 0.0
    %1518 = vmatprep.subr.mxu0 0.0
    %1519 = vmatpush2.msra.mxu0 0.0
    %1520 = vmatprep.subr.mxu0 0.0
    %1521 = vmatpush2.msra.mxu0 0.0
    %1522 = vmatprep.subr.mxu0 0.0
    %1523 = vmatpush2.msra.mxu0 0.0
    %1524 = vmatprep.subr.mxu0 0.0
    %1525 = vmatpush2.msra.mxu0 0.0
    %1526 = vmatprep.subr.mxu0 0.0
    %1527 = vmatpush2.msra.mxu0 0.0
    %1528 = vmatprep.mubr.f32.mxu0 0.0
    %v1529 = vand.u32 %v1269, 4294901760
    %1530 = vmatmul.mubr.f32.gmra.mxu0 %v1529
    %v1531 = vpop.f32.mrf.mxu0
    %v1532 = vadd.f32 %v1381, %v1531
    %v1533 = vpop.f32.mrf.mxu0
    %1534 = vdwg.mxu0
    %1535 = vmatprep.subr.mxu0 0.0
    %v1536 = vand.u32 %v1285, 4294901760
    %v1537 = vsub.f32 %v1285, %v1536
    %1538 = vmatpush1.msra.mxu0 %v1537
    %1539 = vmatprep.subr.mxu0 0.0
    %v1540 = vand.u32 %v1284, 4294901760
    %v1541 = vsub.f32 %v1284, %v1540
    %1542 = vmatpush1.msra.mxu0 %v1541
    %1543 = vmatprep.subr.mxu0 0.0
    %v1544 = vand.u32 %v1283, 4294901760
    %v1545 = vsub.f32 %v1283, %v1544
    %1546 = vmatpush1.msra.mxu0 %v1545
    %1547 = vmatprep.subr.mxu0 0.0
    %v1548 = vand.u32 %v1282, 4294901760
    %v1549 = vsub.f32 %v1282, %v1548
    %1550 = vmatpush1.msra.mxu0 %v1549
    %1551 = vmatprep.subr.mxu0 0.0
    %v1552 = vand.u32 %v1281, 4294901760
    %v1553 = vsub.f32 %v1281, %v1552
    %1554 = vmatpush1.msra.mxu0 %v1553
    %1555 = vmatprep.subr.mxu0 0.0
    %v1556 = vand.u32 %v1280, 4294901760
    %v1557 = vsub.f32 %v1280, %v1556
    %1558 = vmatpush1.msra.mxu0 %v1557
    %1559 = vmatprep.subr.mxu0 0.0
    %v1560 = vand.u32 %v1279, 4294901760
    %v1561 = vsub.f32 %v1279, %v1560
    %1562 = vmatpush1.msra.mxu0 %v1561
    %1563 = vmatprep.subr.mxu0 0.0
    %v1564 = vand.u32 %v1278, 4294901760
    %v1565 = vsub.f32 %v1278, %v1564
    %1566 = vmatpush1.msra.mxu0 %v1565
    %1567 = vmatprep.subr.mxu0 0.0
    %v1568 = vand.u32 %v1277, 4294901760
    %v1569 = vsub.f32 %v1277, %v1568
    %1570 = vmatpush1.msra.mxu0 %v1569
    %1571 = vmatprep.subr.mxu0 0.0
    %v1572 = vand.u32 %v1276, 4294901760
    %v1573 = vsub.f32 %v1276, %v1572
    %1574 = vmatpush1.msra.mxu0 %v1573
    %1575 = vmatprep.subr.mxu0 0.0
    %v1576 = vand.u32 %v1275, 4294901760
    %v1577 = vsub.f32 %v1275, %v1576
    %1578 = vmatpush1.msra.mxu0 %v1577
    %1579 = vmatprep.subr.mxu0 0.0
    %v1580 = vand.u32 %v1274, 4294901760
    %v1581 = vsub.f32 %v1274, %v1580
    %1582 = vmatpush1.msra.mxu0 %v1581
    %1583 = vmatprep.subr.mxu0 0.0
    %v1584 = vand.u32 %v1273, 4294901760
    %v1585 = vsub.f32 %v1273, %v1584
    %1586 = vmatpush1.msra.mxu0 %v1585
    %1587 = vmatprep.subr.mxu0 0.0
    %v1588 = vand.u32 %v1272, 4294901760
    %v1589 = vsub.f32 %v1272, %v1588
    %1590 = vmatpush1.msra.mxu0 %v1589
    %1591 = vmatprep.subr.mxu0 0.0
    %v1592 = vand.u32 %v1271, 4294901760
    %v1593 = vsub.f32 %v1271, %v1592
    %1594 = vmatpush1.msra.mxu0 %v1593
    %1595 = vmatprep.subr.mxu0 0.0
    %v1596 = vand.u32 %v1270, 4294901760
    %v1597 = vsub.f32 %v1270, %v1596
    %1598 = vmatpush1.msra.mxu0 %v1597
    %1599 = vmatprep.subr.mxu0 0.0
    %1600 = vmatpush2.msra.mxu0 0.0
    %1601 = vmatprep.subr.mxu0 0.0
    %1602 = vmatpush2.msra.mxu0 0.0
    %1603 = vmatprep.subr.mxu0 0.0
    %1604 = vmatpush2.msra.mxu0 0.0
    %1605 = vmatprep.subr.mxu0 0.0
    %1606 = vmatpush2.msra.mxu0 0.0
    %1607 = vmatprep.subr.mxu0 0.0
    %1608 = vmatpush2.msra.mxu0 0.0
    %1609 = vmatprep.subr.mxu0 0.0
    %1610 = vmatpush2.msra.mxu0 0.0
    %1611 = vmatprep.subr.mxu0 0.0
    %1612 = vmatpush2.msra.mxu0 0.0
    %1613 = vmatprep.subr.mxu0 0.0
    %1614 = vmatpush2.msra.mxu0 0.0
    %1615 = vmatprep.subr.mxu0 0.0
    %1616 = vmatpush2.msra.mxu0 0.0
    %1617 = vmatprep.subr.mxu0 0.0
    %1618 = vmatpush2.msra.mxu0 0.0
    %1619 = vmatprep.subr.mxu0 0.0
    %1620 = vmatpush2.msra.mxu0 0.0
    %1621 = vmatprep.subr.mxu0 0.0
    %1622 = vmatpush2.msra.mxu0 0.0
    %1623 = vmatprep.subr.mxu0 0.0
    %1624 = vmatpush2.msra.mxu0 0.0
    %1625 = vmatprep.subr.mxu0 0.0
    %1626 = vmatpush2.msra.mxu0 0.0
    %1627 = vmatprep.subr.mxu0 0.0
    %1628 = vmatpush2.msra.mxu0 0.0
    %1629 = vmatprep.subr.mxu0 0.0
    %1630 = vmatpush2.msra.mxu0 0.0
    %1631 = vmatprep.mubr.f32.mxu0 0.0
    %v1632 = vand.u32 %v1269, 4294901760
    %v1633 = vsub.f32 %v1269, %v1632
    %1634 = vmatmul.mubr.f32.gmra.mxu0 %v1633
    %v1635 = vpop.f32.mrf.mxu0
    %v1636 = vadd.f32 %v1532, %v1635
    %v1637 = vpop.f32.mrf.mxu0
    %1638 = vdwg.mxu0
    %1639 = vmatprep.subr.mxu0 0.0
    %v1640 = vand.u32 %v1285, 4294901760
    %1641 = vmatpush1.msra.mxu0 %v1640
    %1642 = vmatprep.subr.mxu0 0.0
    %v1643 = vand.u32 %v1284, 4294901760
    %1644 = vmatpush1.msra.mxu0 %v1643
    %1645 = vmatprep.subr.mxu0 0.0
    %v1646 = vand.u32 %v1283, 4294901760
    %1647 = vmatpush1.msra.mxu0 %v1646
    %1648 = vmatprep.subr.mxu0 0.0
    %v1649 = vand.u32 %v1282, 4294901760
    %1650 = vmatpush1.msra.mxu0 %v1649
    %1651 = vmatprep.subr.mxu0 0.0
    %v1652 = vand.u32 %v1281, 4294901760
    %1653 = vmatpush1.msra.mxu0 %v1652
    %1654 = vmatprep.subr.mxu0 0.0
    %v1655 = vand.u32 %v1280, 4294901760
    %1656 = vmatpush1.msra.mxu0 %v1655
    %1657 = vmatprep.subr.mxu0 0.0
    %v1658 = vand.u32 %v1279, 4294901760
    %1659 = vmatpush1.msra.mxu0 %v1658
    %1660 = vmatprep.subr.mxu0 0.0
    %v1661 = vand.u32 %v1278, 4294901760
    %1662 = vmatpush1.msra.mxu0 %v1661
    %1663 = vmatprep.subr.mxu0 0.0
    %v1664 = vand.u32 %v1277, 4294901760
    %1665 = vmatpush1.msra.mxu0 %v1664
    %1666 = vmatprep.subr.mxu0 0.0
    %v1667 = vand.u32 %v1276, 4294901760
    %1668 = vmatpush1.msra.mxu0 %v1667
    %1669 = vmatprep.subr.mxu0 0.0
    %v1670 = vand.u32 %v1275, 4294901760
    %1671 = vmatpush1.msra.mxu0 %v1670
    %1672 = vmatprep.subr.mxu0 0.0
    %v1673 = vand.u32 %v1274, 4294901760
    %1674 = vmatpush1.msra.mxu0 %v1673
    %1675 = vmatprep.subr.mxu0 0.0
    %v1676 = vand.u32 %v1273, 4294901760
    %1677 = vmatpush1.msra.mxu0 %v1676
    %1678 = vmatprep.subr.mxu0 0.0
    %v1679 = vand.u32 %v1272, 4294901760
    %1680 = vmatpush1.msra.mxu0 %v1679
    %1681 = vmatprep.subr.mxu0 0.0
    %v1682 = vand.u32 %v1271, 4294901760
    %1683 = vmatpush1.msra.mxu0 %v1682
    %1684 = vmatprep.subr.mxu0 0.0
    %v1685 = vand.u32 %v1270, 4294901760
    %1686 = vmatpush1.msra.mxu0 %v1685
    %1687 = vmatprep.subr.mxu0 0.0
    %1688 = vmatpush2.msra.mxu0 0.0
    %1689 = vmatprep.subr.mxu0 0.0
    %1690 = vmatpush2.msra.mxu0 0.0
    %1691 = vmatprep.subr.mxu0 0.0
    %1692 = vmatpush2.msra.mxu0 0.0
    %1693 = vmatprep.subr.mxu0 0.0
    %1694 = vmatpush2.msra.mxu0 0.0
    %1695 = vmatprep.subr.mxu0 0.0
    %1696 = vmatpush2.msra.mxu0 0.0
    %1697 = vmatprep.subr.mxu0 0.0
    %1698 = vmatpush2.msra.mxu0 0.0
    %1699 = vmatprep.subr.mxu0 0.0
    %1700 = vmatpush2.msra.mxu0 0.0
    %1701 = vmatprep.subr.mxu0 0.0
    %1702 = vmatpush2.msra.mxu0 0.0
    %1703 = vmatprep.subr.mxu0 0.0
    %1704 = vmatpush2.msra.mxu0 0.0
    %1705 = vmatprep.subr.mxu0 0.0
    %1706 = vmatpush2.msra.mxu0 0.0
    %1707 = vmatprep.subr.mxu0 0.0
    %1708 = vmatpush2.msra.mxu0 0.0
    %1709 = vmatprep.subr.mxu0 0.0
    %1710 = vmatpush2.msra.mxu0 0.0
    %1711 = vmatprep.subr.mxu0 0.0
    %1712 = vmatpush2.msra.mxu0 0.0
    %1713 = vmatprep.subr.mxu0 0.0
    %1714 = vmatpush2.msra.mxu0 0.0
    %1715 = vmatprep.subr.mxu0 0.0
    %1716 = vmatpush2.msra.mxu0 0.0
    %1717 = vmatprep.subr.mxu0 0.0
    %1718 = vmatpush2.msra.mxu0 0.0
    %1719 = vmatprep.mubr.f32.mxu0 0.0
    %v1720 = vand.u32 %v1269, 4294901760
    %v1721 = vsub.f32 %v1269, %v1720
    %v1722 = vand.u32 %v1721, 4294901760
    %1723 = vmatmul.mubr.f32.gmra.mxu0 %v1722
    %v1724 = vpop.f32.mrf.mxu0
    %v1725 = vadd.f32 %v1636, %v1724
    %v1726 = vpop.f32.mrf.mxu0
    %1727 = vdwg.mxu0
    %1728 = vmatprep.subr.mxu0 0.0
    %v1729 = vand.u32 %v1285, 4294901760
    %v1730 = vsub.f32 %v1285, %v1729
    %v1731 = vand.u32 %v1730, 4294901760
    %1732 = vmatpush1.msra.mxu0 %v1731
    %1733 = vmatprep.subr.mxu0 0.0
    %v1734 = vand.u32 %v1284, 4294901760
    %v1735 = vsub.f32 %v1284, %v1734
    %v1736 = vand.u32 %v1735, 4294901760
    %1737 = vmatpush1.msra.mxu0 %v1736
    %1738 = vmatprep.subr.mxu0 0.0
    %v1739 = vand.u32 %v1283, 4294901760
    %v1740 = vsub.f32 %v1283, %v1739
    %v1741 = vand.u32 %v1740, 4294901760
    %1742 = vmatpush1.msra.mxu0 %v1741
    %1743 = vmatprep.subr.mxu0 0.0
    %v1744 = vand.u32 %v1282, 4294901760
    %v1745 = vsub.f32 %v1282, %v1744
    %v1746 = vand.u32 %v1745, 4294901760
    %1747 = vmatpush1.msra.mxu0 %v1746
    %1748 = vmatprep.subr.mxu0 0.0
    %v1749 = vand.u32 %v1281, 4294901760
    %v1750 = vsub.f32 %v1281, %v1749
    %v1751 = vand.u32 %v1750, 4294901760
    %1752 = vmatpush1.msra.mxu0 %v1751
    %1753 = vmatprep.subr.mxu0 0.0
    %v1754 = vand.u32 %v1280, 4294901760
    %v1755 = vsub.f32 %v1280, %v1754
    %v1756 = vand.u32 %v1755, 4294901760
    %1757 = vmatpush1.msra.mxu0 %v1756
    %1758 = vmatprep.subr.mxu0 0.0
    %v1759 = vand.u32 %v1279, 4294901760
    %v1760 = vsub.f32 %v1279, %v1759
    %v1761 = vand.u32 %v1760, 4294901760
    %1762 = vmatpush1.msra.mxu0 %v1761
    %1763 = vmatprep.subr.mxu0 0.0
    %v1764 = vand.u32 %v1278, 4294901760
    %v1765 = vsub.f32 %v1278, %v1764
    %v1766 = vand.u32 %v1765, 4294901760
    %1767 = vmatpush1.msra.mxu0 %v1766
    %1768 = vmatprep.subr.mxu0 0.0
    %v1769 = vand.u32 %v1277, 4294901760
    %v1770 = vsub.f32 %v1277, %v1769
    %v1771 = vand.u32 %v1770, 4294901760
    %1772 = vmatpush1.msra.mxu0 %v1771
    %1773 = vmatprep.subr.mxu0 0.0
    %v1774 = vand.u32 %v1276, 4294901760
    %v1775 = vsub.f32 %v1276, %v1774
    %v1776 = vand.u32 %v1775, 4294901760
    %1777 = vmatpush1.msra.mxu0 %v1776
    %1778 = vmatprep.subr.mxu0 0.0
    %v1779 = vand.u32 %v1275, 4294901760
    %v1780 = vsub.f32 %v1275, %v1779
    %v1781 = vand.u32 %v1780, 4294901760
    %1782 = vmatpush1.msra.mxu0 %v1781
    %1783 = vmatprep.subr.mxu0 0.0
    %v1784 = vand.u32 %v1274, 4294901760
    %v1785 = vsub.f32 %v1274, %v1784
    %v1786 = vand.u32 %v1785, 4294901760
    %1787 = vmatpush1.msra.mxu0 %v1786
    %1788 = vmatprep.subr.mxu0 0.0
    %v1789 = vand.u32 %v1273, 4294901760
    %v1790 = vsub.f32 %v1273, %v1789
    %v1791 = vand.u32 %v1790, 4294901760
    %1792 = vmatpush1.msra.mxu0 %v1791
    %1793 = vmatprep.subr.mxu0 0.0
    %v1794 = vand.u32 %v1272, 4294901760
    %v1795 = vsub.f32 %v1272, %v1794
    %v1796 = vand.u32 %v1795, 4294901760
    %1797 = vmatpush1.msra.mxu0 %v1796
    %1798 = vmatprep.subr.mxu0 0.0
    %v1799 = vand.u32 %v1271, 4294901760
    %v1800 = vsub.f32 %v1271, %v1799
    %v1801 = vand.u32 %v1800, 4294901760
    %1802 = vmatpush1.msra.mxu0 %v1801
    %1803 = vmatprep.subr.mxu0 0.0
    %v1804 = vand.u32 %v1270, 4294901760
    %v1805 = vsub.f32 %v1270, %v1804
    %v1806 = vand.u32 %v1805, 4294901760
    %1807 = vmatpush1.msra.mxu0 %v1806
    %1808 = vmatprep.subr.mxu0 0.0
    %1809 = vmatpush2.msra.mxu0 0.0
    %1810 = vmatprep.subr.mxu0 0.0
    %1811 = vmatpush2.msra.mxu0 0.0
    %1812 = vmatprep.subr.mxu0 0.0
    %1813 = vmatpush2.msra.mxu0 0.0
    %1814 = vmatprep.subr.mxu0 0.0
    %1815 = vmatpush2.msra.mxu0 0.0
    %1816 = vmatprep.subr.mxu0 0.0
    %1817 = vmatpush2.msra.mxu0 0.0
    %1818 = vmatprep.subr.mxu0 0.0
    %1819 = vmatpush2.msra.mxu0 0.0
    %1820 = vmatprep.subr.mxu0 0.0
    %1821 = vmatpush2.msra.mxu0 0.0
    %1822 = vmatprep.subr.mxu0 0.0
    %1823 = vmatpush2.msra.mxu0 0.0
    %1824 = vmatprep.subr.mxu0 0.0
    %1825 = vmatpush2.msra.mxu0 0.0
    %1826 = vmatprep.subr.mxu0 0.0
    %1827 = vmatpush2.msra.mxu0 0.0
    %1828 = vmatprep.subr.mxu0 0.0
    %1829 = vmatpush2.msra.mxu0 0.0
    %1830 = vmatprep.subr.mxu0 0.0
    %1831 = vmatpush2.msra.mxu0 0.0
    %1832 = vmatprep.subr.mxu0 0.0
    %1833 = vmatpush2.msra.mxu0 0.0
    %1834 = vmatprep.subr.mxu0 0.0
    %1835 = vmatpush2.msra.mxu0 0.0
    %1836 = vmatprep.subr.mxu0 0.0
    %1837 = vmatpush2.msra.mxu0 0.0
    %1838 = vmatprep.subr.mxu0 0.0
    %1839 = vmatpush2.msra.mxu0 0.0
    %1840 = vmatprep.mubr.f32.mxu0 0.0
    %v1841 = vand.u32 %v1269, 4294901760
    %1842 = vmatmul.mubr.f32.gmra.mxu0 %v1841
    %v1843 = vpop.f32.mrf.mxu0
    %v1844 = vadd.f32 %v1725, %v1843
    %v1845 = vpop.f32.mrf.mxu0
    %1846 = vdwg.mxu0
    %1847 = vmatprep.subr.mxu0 0.0
    %v1848 = vand.u32 %v1285, 4294901760
    %1849 = vmatpush1.msra.mxu0 %v1848
    %1850 = vmatprep.subr.mxu0 0.0
    %v1851 = vand.u32 %v1284, 4294901760
    %1852 = vmatpush1.msra.mxu0 %v1851
    %1853 = vmatprep.subr.mxu0 0.0
    %v1854 = vand.u32 %v1283, 4294901760
    %1855 = vmatpush1.msra.mxu0 %v1854
    %1856 = vmatprep.subr.mxu0 0.0
    %v1857 = vand.u32 %v1282, 4294901760
    %1858 = vmatpush1.msra.mxu0 %v1857
    %1859 = vmatprep.subr.mxu0 0.0
    %v1860 = vand.u32 %v1281, 4294901760
    %1861 = vmatpush1.msra.mxu0 %v1860
    %1862 = vmatprep.subr.mxu0 0.0
    %v1863 = vand.u32 %v1280, 4294901760
    %1864 = vmatpush1.msra.mxu0 %v1863
    %1865 = vmatprep.subr.mxu0 0.0
    %v1866 = vand.u32 %v1279, 4294901760
    %1867 = vmatpush1.msra.mxu0 %v1866
    %1868 = vmatprep.subr.mxu0 0.0
    %v1869 = vand.u32 %v1278, 4294901760
    %1870 = vmatpush1.msra.mxu0 %v1869
    %1871 = vmatprep.subr.mxu0 0.0
    %v1872 = vand.u32 %v1277, 4294901760
    %1873 = vmatpush1.msra.mxu0 %v1872
    %1874 = vmatprep.subr.mxu0 0.0
    %v1875 = vand.u32 %v1276, 4294901760
    %1876 = vmatpush1.msra.mxu0 %v1875
    %1877 = vmatprep.subr.mxu0 0.0
    %v1878 = vand.u32 %v1275, 4294901760
    %1879 = vmatpush1.msra.mxu0 %v1878
    %1880 = vmatprep.subr.mxu0 0.0
    %v1881 = vand.u32 %v1274, 4294901760
    %1882 = vmatpush1.msra.mxu0 %v1881
    %1883 = vmatprep.subr.mxu0 0.0
    %v1884 = vand.u32 %v1273, 4294901760
    %1885 = vmatpush1.msra.mxu0 %v1884
    %1886 = vmatprep.subr.mxu0 0.0
    %v1887 = vand.u32 %v1272, 4294901760
    %1888 = vmatpush1.msra.mxu0 %v1887
    %1889 = vmatprep.subr.mxu0 0.0
    %v1890 = vand.u32 %v1271, 4294901760
    %1891 = vmatpush1.msra.mxu0 %v1890
    %1892 = vmatprep.subr.mxu0 0.0
    %v1893 = vand.u32 %v1270, 4294901760
    %1894 = vmatpush1.msra.mxu0 %v1893
    %1895 = vmatprep.subr.mxu0 0.0
    %1896 = vmatpush2.msra.mxu0 0.0
    %1897 = vmatprep.subr.mxu0 0.0
    %1898 = vmatpush2.msra.mxu0 0.0
    %1899 = vmatprep.subr.mxu0 0.0
    %1900 = vmatpush2.msra.mxu0 0.0
    %1901 = vmatprep.subr.mxu0 0.0
    %1902 = vmatpush2.msra.mxu0 0.0
    %1903 = vmatprep.subr.mxu0 0.0
    %1904 = vmatpush2.msra.mxu0 0.0
    %1905 = vmatprep.subr.mxu0 0.0
    %1906 = vmatpush2.msra.mxu0 0.0
    %1907 = vmatprep.subr.mxu0 0.0
    %1908 = vmatpush2.msra.mxu0 0.0
    %1909 = vmatprep.subr.mxu0 0.0
    %1910 = vmatpush2.msra.mxu0 0.0
    %1911 = vmatprep.subr.mxu0 0.0
    %1912 = vmatpush2.msra.mxu0 0.0
    %1913 = vmatprep.subr.mxu0 0.0
    %1914 = vmatpush2.msra.mxu0 0.0
    %1915 = vmatprep.subr.mxu0 0.0
    %1916 = vmatpush2.msra.mxu0 0.0
    %1917 = vmatprep.subr.mxu0 0.0
    %1918 = vmatpush2.msra.mxu0 0.0
    %1919 = vmatprep.subr.mxu0 0.0
    %1920 = vmatpush2.msra.mxu0 0.0
    %1921 = vmatprep.subr.mxu0 0.0
    %1922 = vmatpush2.msra.mxu0 0.0
    %1923 = vmatprep.subr.mxu0 0.0
    %1924 = vmatpush2.msra.mxu0 0.0
    %1925 = vmatprep.subr.mxu0 0.0
    %1926 = vmatpush2.msra.mxu0 0.0
    %1927 = vmatprep.mubr.f32.mxu0 0.0
    %v1928 = vand.u32 %v1269, 4294901760
    %1929 = vmatmul.mubr.f32.gmra.mxu0 %v1928
    %v1930 = vpop.f32.mrf.mxu0
    %v1931 = vadd.f32 %v1844, %v1930
    %v1932 = vpop.f32.mrf.mxu0
    %1933 = vdwg.mxu0
    %vm1934 = vcmp.gt.f32.partialorder %v1931, 0.0
    %v1935 = vmul.f32 %v1931, 0.2
    %v1936 = vsel %vm1934, %v1931, %v1935
    %v1937 = vld [vmem:[#allocation10] sm:$0xff]
    %v1938 = vld [vmem:[#allocation10 + $0x8] sm:$0xff]
    %v1939 = vld [vmem:[#allocation10 + $0x10] sm:$0xff]
    %v1940 = vld [vmem:[#allocation10 + $0x18] sm:$0xff]
    %v1941 = vld [vmem:[#allocation10 + $0x20] sm:$0xff]
    %v1942 = vld [vmem:[#allocation10 + $0x28] sm:$0xff]
    %v1943 = vld [vmem:[#allocation10 + $0x30] sm:$0xff]
    %v1944 = vld [vmem:[#allocation10 + $0x38] sm:$0xff]
    %v1945 = vld [vmem:[#allocation10 + $0x40] sm:$0xff]
    %v1946 = vld [vmem:[#allocation10 + $0x48] sm:$0xff]
    %v1947 = vld [vmem:[#allocation10 + $0x50] sm:$0xff]
    %v1948 = vld [vmem:[#allocation10 + $0x58] sm:$0xff]
    %v1949 = vld [vmem:[#allocation10 + $0x60] sm:$0xff]
    %v1950 = vld [vmem:[#allocation10 + $0x68] sm:$0xff]
    %v1951 = vld [vmem:[#allocation10 + $0x70] sm:$0xff]
    %v1952 = vld [vmem:[#allocation10 + $0x78] sm:$0xff]
    %v1953 = vld [vmem:[#allocation10 + $0x80] sm:$0xff]
    %v1954 = vld [vmem:[#allocation10 + $0x88] sm:$0xff]
    %v1955 = vld [vmem:[#allocation10 + $0x90] sm:$0xff]
    %v1956 = vld [vmem:[#allocation10 + $0x98] sm:$0xff]
    %v1957 = vld [vmem:[#allocation10 + $0xa0] sm:$0xff]
    %v1958 = vld [vmem:[#allocation10 + $0xa8] sm:$0xff]
    %v1959 = vld [vmem:[#allocation10 + $0xb0] sm:$0xff]
    %v1960 = vld [vmem:[#allocation10 + $0xb8] sm:$0xff]
    %v1961 = vld [vmem:[#allocation10 + $0xc0] sm:$0xff]
    %v1962 = vld [vmem:[#allocation10 + $0xc8] sm:$0xff]
    %v1963 = vld [vmem:[#allocation10 + $0xd0] sm:$0xff]
    %v1964 = vld [vmem:[#allocation10 + $0xd8] sm:$0xff]
    %v1965 = vld [vmem:[#allocation10 + $0xe0] sm:$0xff]
    %v1966 = vld [vmem:[#allocation10 + $0xe8] sm:$0xff]
    %v1967 = vld [vmem:[#allocation10 + $0xf0] sm:$0xff]
    %v1968 = vld [vmem:[#allocation10 + $0xf8] sm:$0xff]
    %v1969 = vld [vmem:[%s8] sm:$0x3]
    %v1971 = vlaneseq
    %v1972 = vshrl.u32 %v1971, 7
    %v1973 = vsub.s32 0, %v1972
    %v1974 = vrot.slane %v1969, %v1973
    %v1975 = vlaneseq
    %v1976 = vshrl.u32 %v1975, 7
    %v1977 = vsub.s32 1, %v1976
    %v1978 = vrot.slane %v1969, %v1977
    %v1981 = vand.u32 %v1968, 4294901760
    %1982 = vmatprep.subr.mxu0 %v1981
    %v1983 = vand.u32 %v1967, 4294901760
    %1984 = vmatpush1.msra.mxu0 %v1983
    %v1985 = vand.u32 %v1966, 4294901760
    %1986 = vmatprep.subr.mxu0 %v1985
    %v1987 = vand.u32 %v1965, 4294901760
    %1988 = vmatpush1.msra.mxu0 %v1987
    %v1989 = vand.u32 %v1964, 4294901760
    %1990 = vmatprep.subr.mxu0 %v1989
    %v1991 = vand.u32 %v1963, 4294901760
    %1992 = vmatpush1.msra.mxu0 %v1991
    %v1993 = vand.u32 %v1962, 4294901760
    %1994 = vmatprep.subr.mxu0 %v1993
    %v1995 = vand.u32 %v1961, 4294901760
    %1996 = vmatpush1.msra.mxu0 %v1995
    %v1997 = vand.u32 %v1960, 4294901760
    %1998 = vmatprep.subr.mxu0 %v1997
    %v1999 = vand.u32 %v1959, 4294901760
    %2000 = vmatpush1.msra.mxu0 %v1999
    %v2001 = vand.u32 %v1958, 4294901760
    %2002 = vmatprep.subr.mxu0 %v2001
    %v2003 = vand.u32 %v1957, 4294901760
    %2004 = vmatpush1.msra.mxu0 %v2003
    %v2005 = vand.u32 %v1956, 4294901760
    %2006 = vmatprep.subr.mxu0 %v2005
    %v2007 = vand.u32 %v1955, 4294901760
    %2008 = vmatpush1.msra.mxu0 %v2007
    %v2009 = vand.u32 %v1954, 4294901760
    %2010 = vmatprep.subr.mxu0 %v2009
    %v2011 = vand.u32 %v1953, 4294901760
    %2012 = vmatpush1.msra.mxu0 %v2011
    %v2013 = vand.u32 %v1952, 4294901760
    %2014 = vmatprep.subr.mxu0 %v2013
    %v2015 = vand.u32 %v1951, 4294901760
    %2016 = vmatpush1.msra.mxu0 %v2015
    %v2017 = vand.u32 %v1950, 4294901760
    %2018 = vmatprep.subr.mxu0 %v2017
    %v2019 = vand.u32 %v1949, 4294901760
    %2020 = vmatpush1.msra.mxu0 %v2019
    %v2021 = vand.u32 %v1948, 4294901760
    %2022 = vmatprep.subr.mxu0 %v2021
    %v2023 = vand.u32 %v1947, 4294901760
    %2024 = vmatpush1.msra.mxu0 %v2023
    %v2025 = vand.u32 %v1946, 4294901760
    %2026 = vmatprep.subr.mxu0 %v2025
    %v2027 = vand.u32 %v1945, 4294901760
    %2028 = vmatpush1.msra.mxu0 %v2027
    %v2029 = vand.u32 %v1944, 4294901760
    %2030 = vmatprep.subr.mxu0 %v2029
    %v2031 = vand.u32 %v1943, 4294901760
    %2032 = vmatpush1.msra.mxu0 %v2031
    %v2033 = vand.u32 %v1942, 4294901760
    %2034 = vmatprep.subr.mxu0 %v2033
    %v2035 = vand.u32 %v1941, 4294901760
    %2036 = vmatpush1.msra.mxu0 %v2035
    %v2037 = vand.u32 %v1940, 4294901760
    %2038 = vmatprep.subr.mxu0 %v2037
    %v2039 = vand.u32 %v1939, 4294901760
    %2040 = vmatpush1.msra.mxu0 %v2039
    %v2041 = vand.u32 %v1938, 4294901760
    %2042 = vmatprep.subr.mxu0 %v2041
    %v2043 = vand.u32 %v1937, 4294901760
    %2044 = vmatpush1.msra.mxu0 %v2043
    %2045 = vmatprep.subr.mxu0 0.0
    %2046 = vmatpush2.msra.mxu0 0.0
    %2047 = vmatprep.subr.mxu0 0.0
    %2048 = vmatpush2.msra.mxu0 0.0
    %2049 = vmatprep.subr.mxu0 0.0
    %2050 = vmatpush2.msra.mxu0 0.0
    %2051 = vmatprep.subr.mxu0 0.0
    %2052 = vmatpush2.msra.mxu0 0.0
    %2053 = vmatprep.subr.mxu0 0.0
    %2054 = vmatpush2.msra.mxu0 0.0
    %2055 = vmatprep.subr.mxu0 0.0
    %2056 = vmatpush2.msra.mxu0 0.0
    %2057 = vmatprep.subr.mxu0 0.0
    %2058 = vmatpush2.msra.mxu0 0.0
    %2059 = vmatprep.subr.mxu0 0.0
    %2060 = vmatpush2.msra.mxu0 0.0
    %2061 = vmatprep.subr.mxu0 0.0
    %2062 = vmatpush2.msra.mxu0 0.0
    %2063 = vmatprep.subr.mxu0 0.0
    %2064 = vmatpush2.msra.mxu0 0.0
    %2065 = vmatprep.subr.mxu0 0.0
    %2066 = vmatpush2.msra.mxu0 0.0
    %2067 = vmatprep.subr.mxu0 0.0
    %2068 = vmatpush2.msra.mxu0 0.0
    %2069 = vmatprep.subr.mxu0 0.0
    %2070 = vmatpush2.msra.mxu0 0.0
    %2071 = vmatprep.subr.mxu0 0.0
    %2072 = vmatpush2.msra.mxu0 0.0
    %2073 = vmatprep.subr.mxu0 0.0
    %2074 = vmatpush2.msra.mxu0 0.0
    %2075 = vmatprep.subr.mxu0 0.0
    %2076 = vmatpush2.msra.mxu0 0.0
    %2077 = vmatprep.mubr.f32.mxu0 0.0
    %v2078 = vand.u32 %v1936, 4294901760
    %v2079 = vsub.f32 %v1936, %v2078
    %v2080 = vand.u32 %v2079, 4294901760
    %v2081 = vsub.f32 %v2079, %v2080
    %v2082 = vand.u32 %v2081, 4294901760
    %2083 = vmatmul.mubr.f32.gmra.mxu0 %v2082
    %v2084 = vpop.f32.mrf.mxu0
    %v2085 = vadd.f32 %v1974, %v2084
    %v2086 = vpop.f32.mrf.mxu0
    %v2087 = vadd.f32 %v1978, %v2086
    %2088 = vdwg.mxu0
    %v2089 = vand.u32 %v1968, 4294901760
    %v2090 = vsub.f32 %v1968, %v2089
    %v2091 = vand.u32 %v2090, 4294901760
    %v2092 = vsub.f32 %v2090, %v2091
    %v2093 = vand.u32 %v2092, 4294901760
    %2094 = vmatprep.subr.mxu0 %v2093
    %v2095 = vand.u32 %v1967, 4294901760
    %v2096 = vsub.f32 %v1967, %v2095
    %v2097 = vand.u32 %v2096, 4294901760
    %v2098 = vsub.f32 %v2096, %v2097
    %v2099 = vand.u32 %v2098, 4294901760
    %2100 = vmatpush1.msra.mxu0 %v2099
    %v2101 = vand.u32 %v1966, 4294901760
    %v2102 = vsub.f32 %v1966, %v2101
    %v2103 = vand.u32 %v2102, 4294901760
    %v2104 = vsub.f32 %v2102, %v2103
    %v2105 = vand.u32 %v2104, 4294901760
    %2106 = vmatprep.subr.mxu0 %v2105
    %v2107 = vand.u32 %v1965, 4294901760
    %v2108 = vsub.f32 %v1965, %v2107
    %v2109 = vand.u32 %v2108, 4294901760
    %v2110 = vsub.f32 %v2108, %v2109
    %v2111 = vand.u32 %v2110, 4294901760
    %2112 = vmatpush1.msra.mxu0 %v2111
    %v2113 = vand.u32 %v1964, 4294901760
    %v2114 = vsub.f32 %v1964, %v2113
    %v2115 = vand.u32 %v2114, 4294901760
    %v2116 = vsub.f32 %v2114, %v2115
    %v2117 = vand.u32 %v2116, 4294901760
    %2118 = vmatprep.subr.mxu0 %v2117
    %v2119 = vand.u32 %v1963, 4294901760
    %v2120 = vsub.f32 %v1963, %v2119
    %v2121 = vand.u32 %v2120, 4294901760
    %v2122 = vsub.f32 %v2120, %v2121
    %v2123 = vand.u32 %v2122, 4294901760
    %2124 = vmatpush1.msra.mxu0 %v2123
    %v2125 = vand.u32 %v1962, 4294901760
    %v2126 = vsub.f32 %v1962, %v2125
    %v2127 = vand.u32 %v2126, 4294901760
    %v2128 = vsub.f32 %v2126, %v2127
    %v2129 = vand.u32 %v2128, 4294901760
    %2130 = vmatprep.subr.mxu0 %v2129
    %v2131 = vand.u32 %v1961, 4294901760
    %v2132 = vsub.f32 %v1961, %v2131
    %v2133 = vand.u32 %v2132, 4294901760
    %v2134 = vsub.f32 %v2132, %v2133
    %v2135 = vand.u32 %v2134, 4294901760
    %2136 = vmatpush1.msra.mxu0 %v2135
    %v2137 = vand.u32 %v1960, 4294901760
    %v2138 = vsub.f32 %v1960, %v2137
    %v2139 = vand.u32 %v2138, 4294901760
    %v2140 = vsub.f32 %v2138, %v2139
    %v2141 = vand.u32 %v2140, 4294901760
    %2142 = vmatprep.subr.mxu0 %v2141
    %v2143 = vand.u32 %v1959, 4294901760
    %v2144 = vsub.f32 %v1959, %v2143
    %v2145 = vand.u32 %v2144, 4294901760
    %v2146 = vsub.f32 %v2144, %v2145
    %v2147 = vand.u32 %v2146, 4294901760
    %2148 = vmatpush1.msra.mxu0 %v2147
    %v2149 = vand.u32 %v1958, 4294901760
    %v2150 = vsub.f32 %v1958, %v2149
    %v2151 = vand.u32 %v2150, 4294901760
    %v2152 = vsub.f32 %v2150, %v2151
    %v2153 = vand.u32 %v2152, 4294901760
    %2154 = vmatprep.subr.mxu0 %v2153
    %v2155 = vand.u32 %v1957, 4294901760
    %v2156 = vsub.f32 %v1957, %v2155
    %v2157 = vand.u32 %v2156, 4294901760
    %v2158 = vsub.f32 %v2156, %v2157
    %v2159 = vand.u32 %v2158, 4294901760
    %2160 = vmatpush1.msra.mxu0 %v2159
    %v2161 = vand.u32 %v1956, 4294901760
    %v2162 = vsub.f32 %v1956, %v2161
    %v2163 = vand.u32 %v2162, 4294901760
    %v2164 = vsub.f32 %v2162, %v2163
    %v2165 = vand.u32 %v2164, 4294901760
    %2166 = vmatprep.subr.mxu0 %v2165
    %v2167 = vand.u32 %v1955, 4294901760
    %v2168 = vsub.f32 %v1955, %v2167
    %v2169 = vand.u32 %v2168, 4294901760
    %v2170 = vsub.f32 %v2168, %v2169
    %v2171 = vand.u32 %v2170, 4294901760
    %2172 = vmatpush1.msra.mxu0 %v2171
    %v2173 = vand.u32 %v1954, 4294901760
    %v2174 = vsub.f32 %v1954, %v2173
    %v2175 = vand.u32 %v2174, 4294901760
    %v2176 = vsub.f32 %v2174, %v2175
    %v2177 = vand.u32 %v2176, 4294901760
    %2178 = vmatprep.subr.mxu0 %v2177
    %v2179 = vand.u32 %v1953, 4294901760
    %v2180 = vsub.f32 %v1953, %v2179
    %v2181 = vand.u32 %v2180, 4294901760
    %v2182 = vsub.f32 %v2180, %v2181
    %v2183 = vand.u32 %v2182, 4294901760
    %2184 = vmatpush1.msra.mxu0 %v2183
    %v2185 = vand.u32 %v1952, 4294901760
    %v2186 = vsub.f32 %v1952, %v2185
    %v2187 = vand.u32 %v2186, 4294901760
    %v2188 = vsub.f32 %v2186, %v2187
    %v2189 = vand.u32 %v2188, 4294901760
    %2190 = vmatprep.subr.mxu0 %v2189
    %v2191 = vand.u32 %v1951, 4294901760
    %v2192 = vsub.f32 %v1951, %v2191
    %v2193 = vand.u32 %v2192, 4294901760
    %v2194 = vsub.f32 %v2192, %v2193
    %v2195 = vand.u32 %v2194, 4294901760
    %2196 = vmatpush1.msra.mxu0 %v2195
    %v2197 = vand.u32 %v1950, 4294901760
    %v2198 = vsub.f32 %v1950, %v2197
    %v2199 = vand.u32 %v2198, 4294901760
    %v2200 = vsub.f32 %v2198, %v2199
    %v2201 = vand.u32 %v2200, 4294901760
    %2202 = vmatprep.subr.mxu0 %v2201
    %v2203 = vand.u32 %v1949, 4294901760
    %v2204 = vsub.f32 %v1949, %v2203
    %v2205 = vand.u32 %v2204, 4294901760
    %v2206 = vsub.f32 %v2204, %v2205
    %v2207 = vand.u32 %v2206, 4294901760
    %2208 = vmatpush1.msra.mxu0 %v2207
    %v2209 = vand.u32 %v1948, 4294901760
    %v2210 = vsub.f32 %v1948, %v2209
    %v2211 = vand.u32 %v2210, 4294901760
    %v2212 = vsub.f32 %v2210, %v2211
    %v2213 = vand.u32 %v2212, 4294901760
    %2214 = vmatprep.subr.mxu0 %v2213
    %v2215 = vand.u32 %v1947, 4294901760
    %v2216 = vsub.f32 %v1947, %v2215
    %v2217 = vand.u32 %v2216, 4294901760
    %v2218 = vsub.f32 %v2216, %v2217
    %v2219 = vand.u32 %v2218, 4294901760
    %2220 = vmatpush1.msra.mxu0 %v2219
    %v2221 = vand.u32 %v1946, 4294901760
    %v2222 = vsub.f32 %v1946, %v2221
    %v2223 = vand.u32 %v2222, 4294901760
    %v2224 = vsub.f32 %v2222, %v2223
    %v2225 = vand.u32 %v2224, 4294901760
    %2226 = vmatprep.subr.mxu0 %v2225
    %v2227 = vand.u32 %v1945, 4294901760
    %v2228 = vsub.f32 %v1945, %v2227
    %v2229 = vand.u32 %v2228, 4294901760
    %v2230 = vsub.f32 %v2228, %v2229
    %v2231 = vand.u32 %v2230, 4294901760
    %2232 = vmatpush1.msra.mxu0 %v2231
    %v2233 = vand.u32 %v1944, 4294901760
    %v2234 = vsub.f32 %v1944, %v2233
    %v2235 = vand.u32 %v2234, 4294901760
    %v2236 = vsub.f32 %v2234, %v2235
    %v2237 = vand.u32 %v2236, 4294901760
    %2238 = vmatprep.subr.mxu0 %v2237
    %v2239 = vand.u32 %v1943, 4294901760
    %v2240 = vsub.f32 %v1943, %v2239
    %v2241 = vand.u32 %v2240, 4294901760
    %v2242 = vsub.f32 %v2240, %v2241
    %v2243 = vand.u32 %v2242, 4294901760
    %2244 = vmatpush1.msra.mxu0 %v2243
    %v2245 = vand.u32 %v1942, 4294901760
    %v2246 = vsub.f32 %v1942, %v2245
    %v2247 = vand.u32 %v2246, 4294901760
    %v2248 = vsub.f32 %v2246, %v2247
    %v2249 = vand.u32 %v2248, 4294901760
    %2250 = vmatprep.subr.mxu0 %v2249
    %v2251 = vand.u32 %v1941, 4294901760
    %v2252 = vsub.f32 %v1941, %v2251
    %v2253 = vand.u32 %v2252, 4294901760
    %v2254 = vsub.f32 %v2252, %v2253
    %v2255 = vand.u32 %v2254, 4294901760
    %2256 = vmatpush1.msra.mxu0 %v2255
    %v2257 = vand.u32 %v1940, 4294901760
    %v2258 = vsub.f32 %v1940, %v2257
    %v2259 = vand.u32 %v2258, 4294901760
    %v2260 = vsub.f32 %v2258, %v2259
    %v2261 = vand.u32 %v2260, 4294901760
    %2262 = vmatprep.subr.mxu0 %v2261
    %v2263 = vand.u32 %v1939, 4294901760
    %v2264 = vsub.f32 %v1939, %v2263
    %v2265 = vand.u32 %v2264, 4294901760
    %v2266 = vsub.f32 %v2264, %v2265
    %v2267 = vand.u32 %v2266, 4294901760
    %2268 = vmatpush1.msra.mxu0 %v2267
    %v2269 = vand.u32 %v1938, 4294901760
    %v2270 = vsub.f32 %v1938, %v2269
    %v2271 = vand.u32 %v2270, 4294901760
    %v2272 = vsub.f32 %v2270, %v2271
    %v2273 = vand.u32 %v2272, 4294901760
    %2274 = vmatprep.subr.mxu0 %v2273
    %v2275 = vand.u32 %v1937, 4294901760
    %v2276 = vsub.f32 %v1937, %v2275
    %v2277 = vand.u32 %v2276, 4294901760
    %v2278 = vsub.f32 %v2276, %v2277
    %v2279 = vand.u32 %v2278, 4294901760
    %2280 = vmatpush1.msra.mxu0 %v2279
    %2281 = vmatprep.subr.mxu0 0.0
    %2282 = vmatpush2.msra.mxu0 0.0
    %2283 = vmatprep.subr.mxu0 0.0
    %2284 = vmatpush2.msra.mxu0 0.0
    %2285 = vmatprep.subr.mxu0 0.0
    %2286 = vmatpush2.msra.mxu0 0.0
    %2287 = vmatprep.subr.mxu0 0.0
    %2288 = vmatpush2.msra.mxu0 0.0
    %2289 = vmatprep.subr.mxu0 0.0
    %2290 = vmatpush2.msra.mxu0 0.0
    %2291 = vmatprep.subr.mxu0 0.0
    %2292 = vmatpush2.msra.mxu0 0.0
    %2293 = vmatprep.subr.mxu0 0.0
    %2294 = vmatpush2.msra.mxu0 0.0
    %2295 = vmatprep.subr.mxu0 0.0
    %2296 = vmatpush2.msra.mxu0 0.0
    %2297 = vmatprep.subr.mxu0 0.0
    %2298 = vmatpush2.msra.mxu0 0.0
    %2299 = vmatprep.subr.mxu0 0.0
    %2300 = vmatpush2.msra.mxu0 0.0
    %2301 = vmatprep.subr.mxu0 0.0
    %2302 = vmatpush2.msra.mxu0 0.0
    %2303 = vmatprep.subr.mxu0 0.0
    %2304 = vmatpush2.msra.mxu0 0.0
    %2305 = vmatprep.subr.mxu0 0.0
    %2306 = vmatpush2.msra.mxu0 0.0
    %2307 = vmatprep.subr.mxu0 0.0
    %2308 = vmatpush2.msra.mxu0 0.0
    %2309 = vmatprep.subr.mxu0 0.0
    %2310 = vmatpush2.msra.mxu0 0.0
    %2311 = vmatprep.subr.mxu0 0.0
    %2312 = vmatpush2.msra.mxu0 0.0
    %2313 = vmatprep.mubr.f32.mxu0 0.0
    %v2314 = vand.u32 %v1936, 4294901760
    %2315 = vmatmul.mubr.f32.gmra.mxu0 %v2314
    %v2316 = vpop.f32.mrf.mxu0
    %v2317 = vadd.f32 %v2085, %v2316
    %v2318 = vpop.f32.mrf.mxu0
    %v2319 = vadd.f32 %v2087, %v2318
    %2320 = vdwg.mxu0
    %v2321 = vand.u32 %v1968, 4294901760
    %v2322 = vsub.f32 %v1968, %v2321
    %2323 = vmatprep.subr.mxu0 %v2322
    %v2324 = vand.u32 %v1967, 4294901760
    %v2325 = vsub.f32 %v1967, %v2324
    %2326 = vmatpush1.msra.mxu0 %v2325
    %v2327 = vand.u32 %v1966, 4294901760
    %v2328 = vsub.f32 %v1966, %v2327
    %2329 = vmatprep.subr.mxu0 %v2328
    %v2330 = vand.u32 %v1965, 4294901760
    %v2331 = vsub.f32 %v1965, %v2330
    %2332 = vmatpush1.msra.mxu0 %v2331
    %v2333 = vand.u32 %v1964, 4294901760
    %v2334 = vsub.f32 %v1964, %v2333
    %2335 = vmatprep.subr.mxu0 %v2334
    %v2336 = vand.u32 %v1963, 4294901760
    %v2337 = vsub.f32 %v1963, %v2336
    %2338 = vmatpush1.msra.mxu0 %v2337
    %v2339 = vand.u32 %v1962, 4294901760
    %v2340 = vsub.f32 %v1962, %v2339
    %2341 = vmatprep.subr.mxu0 %v2340
    %v2342 = vand.u32 %v1961, 4294901760
    %v2343 = vsub.f32 %v1961, %v2342
    %2344 = vmatpush1.msra.mxu0 %v2343
    %v2345 = vand.u32 %v1960, 4294901760
    %v2346 = vsub.f32 %v1960, %v2345
    %2347 = vmatprep.subr.mxu0 %v2346
    %v2348 = vand.u32 %v1959, 4294901760
    %v2349 = vsub.f32 %v1959, %v2348
    %2350 = vmatpush1.msra.mxu0 %v2349
    %v2351 = vand.u32 %v1958, 4294901760
    %v2352 = vsub.f32 %v1958, %v2351
    %2353 = vmatprep.subr.mxu0 %v2352
    %v2354 = vand.u32 %v1957, 4294901760
    %v2355 = vsub.f32 %v1957, %v2354
    %2356 = vmatpush1.msra.mxu0 %v2355
    %v2357 = vand.u32 %v1956, 4294901760
    %v2358 = vsub.f32 %v1956, %v2357
    %2359 = vmatprep.subr.mxu0 %v2358
    %v2360 = vand.u32 %v1955, 4294901760
    %v2361 = vsub.f32 %v1955, %v2360
    %2362 = vmatpush1.msra.mxu0 %v2361
    %v2363 = vand.u32 %v1954, 4294901760
    %v2364 = vsub.f32 %v1954, %v2363
    %2365 = vmatprep.subr.mxu0 %v2364
    %v2366 = vand.u32 %v1953, 4294901760
    %v2367 = vsub.f32 %v1953, %v2366
    %2368 = vmatpush1.msra.mxu0 %v2367
    %v2369 = vand.u32 %v1952, 4294901760
    %v2370 = vsub.f32 %v1952, %v2369
    %2371 = vmatprep.subr.mxu0 %v2370
    %v2372 = vand.u32 %v1951, 4294901760
    %v2373 = vsub.f32 %v1951, %v2372
    %2374 = vmatpush1.msra.mxu0 %v2373
    %v2375 = vand.u32 %v1950, 4294901760
    %v2376 = vsub.f32 %v1950, %v2375
    %2377 = vmatprep.subr.mxu0 %v2376
    %v2378 = vand.u32 %v1949, 4294901760
    %v2379 = vsub.f32 %v1949, %v2378
    %2380 = vmatpush1.msra.mxu0 %v2379
    %v2381 = vand.u32 %v1948, 4294901760
    %v2382 = vsub.f32 %v1948, %v2381
    %2383 = vmatprep.subr.mxu0 %v2382
    %v2384 = vand.u32 %v1947, 4294901760
    %v2385 = vsub.f32 %v1947, %v2384
    %2386 = vmatpush1.msra.mxu0 %v2385
    %v2387 = vand.u32 %v1946, 4294901760
    %v2388 = vsub.f32 %v1946, %v2387
    %2389 = vmatprep.subr.mxu0 %v2388
    %v2390 = vand.u32 %v1945, 4294901760
    %v2391 = vsub.f32 %v1945, %v2390
    %2392 = vmatpush1.msra.mxu0 %v2391
    %v2393 = vand.u32 %v1944, 4294901760
    %v2394 = vsub.f32 %v1944, %v2393
    %2395 = vmatprep.subr.mxu0 %v2394
    %v2396 = vand.u32 %v1943, 4294901760
    %v2397 = vsub.f32 %v1943, %v2396
    %2398 = vmatpush1.msra.mxu0 %v2397
    %v2399 = vand.u32 %v1942, 4294901760
    %v2400 = vsub.f32 %v1942, %v2399
    %2401 = vmatprep.subr.mxu0 %v2400
    %v2402 = vand.u32 %v1941, 4294901760
    %v2403 = vsub.f32 %v1941, %v2402
    %2404 = vmatpush1.msra.mxu0 %v2403
    %v2405 = vand.u32 %v1940, 4294901760
    %v2406 = vsub.f32 %v1940, %v2405
    %2407 = vmatprep.subr.mxu0 %v2406
    %v2408 = vand.u32 %v1939, 4294901760
    %v2409 = vsub.f32 %v1939, %v2408
    %2410 = vmatpush1.msra.mxu0 %v2409
    %v2411 = vand.u32 %v1938, 4294901760
    %v2412 = vsub.f32 %v1938, %v2411
    %2413 = vmatprep.subr.mxu0 %v2412
    %v2414 = vand.u32 %v1937, 4294901760
    %v2415 = vsub.f32 %v1937, %v2414
    %2416 = vmatpush1.msra.mxu0 %v2415
    %2417 = vmatprep.subr.mxu0 0.0
    %2418 = vmatpush2.msra.mxu0 0.0
    %2419 = vmatprep.subr.mxu0 0.0
    %2420 = vmatpush2.msra.mxu0 0.0
    %2421 = vmatprep.subr.mxu0 0.0
    %2422 = vmatpush2.msra.mxu0 0.0
    %2423 = vmatprep.subr.mxu0 0.0
    %2424 = vmatpush2.msra.mxu0 0.0
    %2425 = vmatprep.subr.mxu0 0.0
    %2426 = vmatpush2.msra.mxu0 0.0
    %2427 = vmatprep.subr.mxu0 0.0
    %2428 = vmatpush2.msra.mxu0 0.0
    %2429 = vmatprep.subr.mxu0 0.0
    %2430 = vmatpush2.msra.mxu0 0.0
    %2431 = vmatprep.subr.mxu0 0.0
    %2432 = vmatpush2.msra.mxu0 0.0
    %2433 = vmatprep.subr.mxu0 0.0
    %2434 = vmatpush2.msra.mxu0 0.0
    %2435 = vmatprep.subr.mxu0 0.0
    %2436 = vmatpush2.msra.mxu0 0.0
    %2437 = vmatprep.subr.mxu0 0.0
    %2438 = vmatpush2.msra.mxu0 0.0
    %2439 = vmatprep.subr.mxu0 0.0
    %2440 = vmatpush2.msra.mxu0 0.0
    %2441 = vmatprep.subr.mxu0 0.0
    %2442 = vmatpush2.msra.mxu0 0.0
    %2443 = vmatprep.subr.mxu0 0.0
    %2444 = vmatpush2.msra.mxu0 0.0
    %2445 = vmatprep.subr.mxu0 0.0
    %2446 = vmatpush2.msra.mxu0 0.0
    %2447 = vmatprep.subr.mxu0 0.0
    %2448 = vmatpush2.msra.mxu0 0.0
    %2449 = vmatprep.mubr.f32.mxu0 0.0
    %v2450 = vand.u32 %v1936, 4294901760
    %v2451 = vsub.f32 %v1936, %v2450
    %2452 = vmatmul.mubr.f32.gmra.mxu0 %v2451
    %v2453 = vpop.f32.mrf.mxu0
    %v2454 = vadd.f32 %v2317, %v2453
    %v2455 = vpop.f32.mrf.mxu0
    %v2456 = vadd.f32 %v2319, %v2455
    %2457 = vdwg.mxu0
    %v2458 = vand.u32 %v1968, 4294901760
    %2459 = vmatprep.subr.mxu0 %v2458
    %v2460 = vand.u32 %v1967, 4294901760
    %2461 = vmatpush1.msra.mxu0 %v2460
    %v2462 = vand.u32 %v1966, 4294901760
    %2463 = vmatprep.subr.mxu0 %v2462
    %v2464 = vand.u32 %v1965, 4294901760
    %2465 = vmatpush1.msra.mxu0 %v2464
    %v2466 = vand.u32 %v1964, 4294901760
    %2467 = vmatprep.subr.mxu0 %v2466
    %v2468 = vand.u32 %v1963, 4294901760
    %2469 = vmatpush1.msra.mxu0 %v2468
    %v2470 = vand.u32 %v1962, 4294901760
    %2471 = vmatprep.subr.mxu0 %v2470
    %v2472 = vand.u32 %v1961, 4294901760
    %2473 = vmatpush1.msra.mxu0 %v2472
    %v2474 = vand.u32 %v1960, 4294901760
    %2475 = vmatprep.subr.mxu0 %v2474
    %v2476 = vand.u32 %v1959, 4294901760
    %2477 = vmatpush1.msra.mxu0 %v2476
    %v2478 = vand.u32 %v1958, 4294901760
    %2479 = vmatprep.subr.mxu0 %v2478
    %v2480 = vand.u32 %v1957, 4294901760
    %2481 = vmatpush1.msra.mxu0 %v2480
    %v2482 = vand.u32 %v1956, 4294901760
    %2483 = vmatprep.subr.mxu0 %v2482
    %v2484 = vand.u32 %v1955, 4294901760
    %2485 = vmatpush1.msra.mxu0 %v2484
    %v2486 = vand.u32 %v1954, 4294901760
    %2487 = vmatprep.subr.mxu0 %v2486
    %v2488 = vand.u32 %v1953, 4294901760
    %2489 = vmatpush1.msra.mxu0 %v2488
    %v2490 = vand.u32 %v1952, 4294901760
    %2491 = vmatprep.subr.mxu0 %v2490
    %v2492 = vand.u32 %v1951, 4294901760
    %2493 = vmatpush1.msra.mxu0 %v2492
    %v2494 = vand.u32 %v1950, 4294901760
    %2495 = vmatprep.subr.mxu0 %v2494
    %v2496 = vand.u32 %v1949, 4294901760
    %2497 = vmatpush1.msra.mxu0 %v2496
    %v2498 = vand.u32 %v1948, 4294901760
    %2499 = vmatprep.subr.mxu0 %v2498
    %v2500 = vand.u32 %v1947, 4294901760
    %2501 = vmatpush1.msra.mxu0 %v2500
    %v2502 = vand.u32 %v1946, 4294901760
    %2503 = vmatprep.subr.mxu0 %v2502
    %v2504 = vand.u32 %v1945, 4294901760
    %2505 = vmatpush1.msra.mxu0 %v2504
    %v2506 = vand.u32 %v1944, 4294901760
    %2507 = vmatprep.subr.mxu0 %v2506
    %v2508 = vand.u32 %v1943, 4294901760
    %2509 = vmatpush1.msra.mxu0 %v2508
    %v2510 = vand.u32 %v1942, 4294901760
    %2511 = vmatprep.subr.mxu0 %v2510
    %v2512 = vand.u32 %v1941, 4294901760
    %2513 = vmatpush1.msra.mxu0 %v2512
    %v2514 = vand.u32 %v1940, 4294901760
    %2515 = vmatprep.subr.mxu0 %v2514
    %v2516 = vand.u32 %v1939, 4294901760
    %2517 = vmatpush1.msra.mxu0 %v2516
    %v2518 = vand.u32 %v1938, 4294901760
    %2519 = vmatprep.subr.mxu0 %v2518
    %v2520 = vand.u32 %v1937, 4294901760
    %2521 = vmatpush1.msra.mxu0 %v2520
    %2522 = vmatprep.subr.mxu0 0.0
    %2523 = vmatpush2.msra.mxu0 0.0
    %2524 = vmatprep.subr.mxu0 0.0
    %2525 = vmatpush2.msra.mxu0 0.0
    %2526 = vmatprep.subr.mxu0 0.0
    %2527 = vmatpush2.msra.mxu0 0.0
    %2528 = vmatprep.subr.mxu0 0.0
    %2529 = vmatpush2.msra.mxu0 0.0
    %2530 = vmatprep.subr.mxu0 0.0
    %2531 = vmatpush2.msra.mxu0 0.0
    %2532 = vmatprep.subr.mxu0 0.0
    %2533 = vmatpush2.msra.mxu0 0.0
    %2534 = vmatprep.subr.mxu0 0.0
    %2535 = vmatpush2.msra.mxu0 0.0
    %2536 = vmatprep.subr.mxu0 0.0
    %2537 = vmatpush2.msra.mxu0 0.0
    %2538 = vmatprep.subr.mxu0 0.0
    %2539 = vmatpush2.msra.mxu0 0.0
    %2540 = vmatprep.subr.mxu0 0.0
    %2541 = vmatpush2.msra.mxu0 0.0
    %2542 = vmatprep.subr.mxu0 0.0
    %2543 = vmatpush2.msra.mxu0 0.0
    %2544 = vmatprep.subr.mxu0 0.0
    %2545 = vmatpush2.msra.mxu0 0.0
    %2546 = vmatprep.subr.mxu0 0.0
    %2547 = vmatpush2.msra.mxu0 0.0
    %2548 = vmatprep.subr.mxu0 0.0
    %2549 = vmatpush2.msra.mxu0 0.0
    %2550 = vmatprep.subr.mxu0 0.0
    %2551 = vmatpush2.msra.mxu0 0.0
    %2552 = vmatprep.subr.mxu0 0.0
    %2553 = vmatpush2.msra.mxu0 0.0
    %2554 = vmatprep.mubr.f32.mxu0 0.0
    %v2555 = vand.u32 %v1936, 4294901760
    %v2556 = vsub.f32 %v1936, %v2555
    %v2557 = vand.u32 %v2556, 4294901760
    %2558 = vmatmul.mubr.f32.gmra.mxu0 %v2557
    %v2559 = vpop.f32.mrf.mxu0
    %v2560 = vadd.f32 %v2454, %v2559
    %v2561 = vpop.f32.mrf.mxu0
    %v2562 = vadd.f32 %v2456, %v2561
    %2563 = vdwg.mxu0
    %v2564 = vand.u32 %v1968, 4294901760
    %v2565 = vsub.f32 %v1968, %v2564
    %v2566 = vand.u32 %v2565, 4294901760
    %2567 = vmatprep.subr.mxu0 %v2566
    %v2568 = vand.u32 %v1967, 4294901760
    %v2569 = vsub.f32 %v1967, %v2568
    %v2570 = vand.u32 %v2569, 4294901760
    %2571 = vmatpush1.msra.mxu0 %v2570
    %v2572 = vand.u32 %v1966, 4294901760
    %v2573 = vsub.f32 %v1966, %v2572
    %v2574 = vand.u32 %v2573, 4294901760
    %2575 = vmatprep.subr.mxu0 %v2574
    %v2576 = vand.u32 %v1965, 4294901760
    %v2577 = vsub.f32 %v1965, %v2576
    %v2578 = vand.u32 %v2577, 4294901760
    %2579 = vmatpush1.msra.mxu0 %v2578
    %v2580 = vand.u32 %v1964, 4294901760
    %v2581 = vsub.f32 %v1964, %v2580
    %v2582 = vand.u32 %v2581, 4294901760
    %2583 = vmatprep.subr.mxu0 %v2582
    %v2584 = vand.u32 %v1963, 4294901760
    %v2585 = vsub.f32 %v1963, %v2584
    %v2586 = vand.u32 %v2585, 4294901760
    %2587 = vmatpush1.msra.mxu0 %v2586
    %v2588 = vand.u32 %v1962, 4294901760
    %v2589 = vsub.f32 %v1962, %v2588
    %v2590 = vand.u32 %v2589, 4294901760
    %2591 = vmatprep.subr.mxu0 %v2590
    %v2592 = vand.u32 %v1961, 4294901760
    %v2593 = vsub.f32 %v1961, %v2592
    %v2594 = vand.u32 %v2593, 4294901760
    %2595 = vmatpush1.msra.mxu0 %v2594
    %v2596 = vand.u32 %v1960, 4294901760
    %v2597 = vsub.f32 %v1960, %v2596
    %v2598 = vand.u32 %v2597, 4294901760
    %2599 = vmatprep.subr.mxu0 %v2598
    %v2600 = vand.u32 %v1959, 4294901760
    %v2601 = vsub.f32 %v1959, %v2600
    %v2602 = vand.u32 %v2601, 4294901760
    %2603 = vmatpush1.msra.mxu0 %v2602
    %v2604 = vand.u32 %v1958, 4294901760
    %v2605 = vsub.f32 %v1958, %v2604
    %v2606 = vand.u32 %v2605, 4294901760
    %2607 = vmatprep.subr.mxu0 %v2606
    %v2608 = vand.u32 %v1957, 4294901760
    %v2609 = vsub.f32 %v1957, %v2608
    %v2610 = vand.u32 %v2609, 4294901760
    %2611 = vmatpush1.msra.mxu0 %v2610
    %v2612 = vand.u32 %v1956, 4294901760
    %v2613 = vsub.f32 %v1956, %v2612
    %v2614 = vand.u32 %v2613, 4294901760
    %2615 = vmatprep.subr.mxu0 %v2614
    %v2616 = vand.u32 %v1955, 4294901760
    %v2617 = vsub.f32 %v1955, %v2616
    %v2618 = vand.u32 %v2617, 4294901760
    %2619 = vmatpush1.msra.mxu0 %v2618
    %v2620 = vand.u32 %v1954, 4294901760
    %v2621 = vsub.f32 %v1954, %v2620
    %v2622 = vand.u32 %v2621, 4294901760
    %2623 = vmatprep.subr.mxu0 %v2622
    %v2624 = vand.u32 %v1953, 4294901760
    %v2625 = vsub.f32 %v1953, %v2624
    %v2626 = vand.u32 %v2625, 4294901760
    %2627 = vmatpush1.msra.mxu0 %v2626
    %v2628 = vand.u32 %v1952, 4294901760
    %v2629 = vsub.f32 %v1952, %v2628
    %v2630 = vand.u32 %v2629, 4294901760
    %2631 = vmatprep.subr.mxu0 %v2630
    %v2632 = vand.u32 %v1951, 4294901760
    %v2633 = vsub.f32 %v1951, %v2632
    %v2634 = vand.u32 %v2633, 4294901760
    %2635 = vmatpush1.msra.mxu0 %v2634
    %v2636 = vand.u32 %v1950, 4294901760
    %v2637 = vsub.f32 %v1950, %v2636
    %v2638 = vand.u32 %v2637, 4294901760
    %2639 = vmatprep.subr.mxu0 %v2638
    %v2640 = vand.u32 %v1949, 4294901760
    %v2641 = vsub.f32 %v1949, %v2640
    %v2642 = vand.u32 %v2641, 4294901760
    %2643 = vmatpush1.msra.mxu0 %v2642
    %v2644 = vand.u32 %v1948, 4294901760
    %v2645 = vsub.f32 %v1948, %v2644
    %v2646 = vand.u32 %v2645, 4294901760
    %2647 = vmatprep.subr.mxu0 %v2646
    %v2648 = vand.u32 %v1947, 4294901760
    %v2649 = vsub.f32 %v1947, %v2648
    %v2650 = vand.u32 %v2649, 4294901760
    %2651 = vmatpush1.msra.mxu0 %v2650
    %v2652 = vand.u32 %v1946, 4294901760
    %v2653 = vsub.f32 %v1946, %v2652
    %v2654 = vand.u32 %v2653, 4294901760
    %2655 = vmatprep.subr.mxu0 %v2654
    %v2656 = vand.u32 %v1945, 4294901760
    %v2657 = vsub.f32 %v1945, %v2656
    %v2658 = vand.u32 %v2657, 4294901760
    %2659 = vmatpush1.msra.mxu0 %v2658
    %v2660 = vand.u32 %v1944, 4294901760
    %v2661 = vsub.f32 %v1944, %v2660
    %v2662 = vand.u32 %v2661, 4294901760
    %2663 = vmatprep.subr.mxu0 %v2662
    %v2664 = vand.u32 %v1943, 4294901760
    %v2665 = vsub.f32 %v1943, %v2664
    %v2666 = vand.u32 %v2665, 4294901760
    %2667 = vmatpush1.msra.mxu0 %v2666
    %v2668 = vand.u32 %v1942, 4294901760
    %v2669 = vsub.f32 %v1942, %v2668
    %v2670 = vand.u32 %v2669, 4294901760
    %2671 = vmatprep.subr.mxu0 %v2670
    %v2672 = vand.u32 %v1941, 4294901760
    %v2673 = vsub.f32 %v1941, %v2672
    %v2674 = vand.u32 %v2673, 4294901760
    %2675 = vmatpush1.msra.mxu0 %v2674
    %v2676 = vand.u32 %v1940, 4294901760
    %v2677 = vsub.f32 %v1940, %v2676
    %v2678 = vand.u32 %v2677, 4294901760
    %2679 = vmatprep.subr.mxu0 %v2678
    %v2680 = vand.u32 %v1939, 4294901760
    %v2681 = vsub.f32 %v1939, %v2680
    %v2682 = vand.u32 %v2681, 4294901760
    %2683 = vmatpush1.msra.mxu0 %v2682
    %v2684 = vand.u32 %v1938, 4294901760
    %v2685 = vsub.f32 %v1938, %v2684
    %v2686 = vand.u32 %v2685, 4294901760
    %2687 = vmatprep.subr.mxu0 %v2686
    %v2688 = vand.u32 %v1937, 4294901760
    %v2689 = vsub.f32 %v1937, %v2688
    %v2690 = vand.u32 %v2689, 4294901760
    %2691 = vmatpush1.msra.mxu0 %v2690
    %2692 = vmatprep.subr.mxu0 0.0
    %2693 = vmatpush2.msra.mxu0 0.0
    %2694 = vmatprep.subr.mxu0 0.0
    %2695 = vmatpush2.msra.mxu0 0.0
    %2696 = vmatprep.subr.mxu0 0.0
    %2697 = vmatpush2.msra.mxu0 0.0
    %2698 = vmatprep.subr.mxu0 0.0
    %2699 = vmatpush2.msra.mxu0 0.0
    %2700 = vmatprep.subr.mxu0 0.0
    %2701 = vmatpush2.msra.mxu0 0.0
    %2702 = vmatprep.subr.mxu0 0.0
    %2703 = vmatpush2.msra.mxu0 0.0
    %2704 = vmatprep.subr.mxu0 0.0
    %2705 = vmatpush2.msra.mxu0 0.0
    %2706 = vmatprep.subr.mxu0 0.0
    %2707 = vmatpush2.msra.mxu0 0.0
    %2708 = vmatprep.subr.mxu0 0.0
    %2709 = vmatpush2.msra.mxu0 0.0
    %2710 = vmatprep.subr.mxu0 0.0
    %2711 = vmatpush2.msra.mxu0 0.0
    %2712 = vmatprep.subr.mxu0 0.0
    %2713 = vmatpush2.msra.mxu0 0.0
    %2714 = vmatprep.subr.mxu0 0.0
    %2715 = vmatpush2.msra.mxu0 0.0
    %2716 = vmatprep.subr.mxu0 0.0
    %2717 = vmatpush2.msra.mxu0 0.0
    %2718 = vmatprep.subr.mxu0 0.0
    %2719 = vmatpush2.msra.mxu0 0.0
    %2720 = vmatprep.subr.mxu0 0.0
    %2721 = vmatpush2.msra.mxu0 0.0
    %2722 = vmatprep.subr.mxu0 0.0
    %2723 = vmatpush2.msra.mxu0 0.0
    %2724 = vmatprep.mubr.f32.mxu0 0.0
    %v2725 = vand.u32 %v1936, 4294901760
    %2726 = vmatmul.mubr.f32.gmra.mxu0 %v2725
    %v2727 = vpop.f32.mrf.mxu0
    %v2728 = vadd.f32 %v2560, %v2727
    %v2729 = vpop.f32.mrf.mxu0
    %v2730 = vadd.f32 %v2562, %v2729
    %2731 = vdwg.mxu0
    %v2732 = vand.u32 %v1968, 4294901760
    %2733 = vmatprep.subr.mxu0 %v2732
    %v2734 = vand.u32 %v1967, 4294901760
    %2735 = vmatpush1.msra.mxu0 %v2734
    %v2736 = vand.u32 %v1966, 4294901760
    %2737 = vmatprep.subr.mxu0 %v2736
    %v2738 = vand.u32 %v1965, 4294901760
    %2739 = vmatpush1.msra.mxu0 %v2738
    %v2740 = vand.u32 %v1964, 4294901760
    %2741 = vmatprep.subr.mxu0 %v2740
    %v2742 = vand.u32 %v1963, 4294901760
    %2743 = vmatpush1.msra.mxu0 %v2742
    %v2744 = vand.u32 %v1962, 4294901760
    %2745 = vmatprep.subr.mxu0 %v2744
    %v2746 = vand.u32 %v1961, 4294901760
    %2747 = vmatpush1.msra.mxu0 %v2746
    %v2748 = vand.u32 %v1960, 4294901760
    %2749 = vmatprep.subr.mxu0 %v2748
    %v2750 = vand.u32 %v1959, 4294901760
    %2751 = vmatpush1.msra.mxu0 %v2750
    %v2752 = vand.u32 %v1958, 4294901760
    %2753 = vmatprep.subr.mxu0 %v2752
    %v2754 = vand.u32 %v1957, 4294901760
    %2755 = vmatpush1.msra.mxu0 %v2754
    %v2756 = vand.u32 %v1956, 4294901760
    %2757 = vmatprep.subr.mxu0 %v2756
    %v2758 = vand.u32 %v1955, 4294901760
    %2759 = vmatpush1.msra.mxu0 %v2758
    %v2760 = vand.u32 %v1954, 4294901760
    %2761 = vmatprep.subr.mxu0 %v2760
    %v2762 = vand.u32 %v1953, 4294901760
    %2763 = vmatpush1.msra.mxu0 %v2762
    %v2764 = vand.u32 %v1952, 4294901760
    %2765 = vmatprep.subr.mxu0 %v2764
    %v2766 = vand.u32 %v1951, 4294901760
    %2767 = vmatpush1.msra.mxu0 %v2766
    %v2768 = vand.u32 %v1950, 4294901760
    %2769 = vmatprep.subr.mxu0 %v2768
    %v2770 = vand.u32 %v1949, 4294901760
    %2771 = vmatpush1.msra.mxu0 %v2770
    %v2772 = vand.u32 %v1948, 4294901760
    %2773 = vmatprep.subr.mxu0 %v2772
    %v2774 = vand.u32 %v1947, 4294901760
    %2775 = vmatpush1.msra.mxu0 %v2774
    %v2776 = vand.u32 %v1946, 4294901760
    %2777 = vmatprep.subr.mxu0 %v2776
    %v2778 = vand.u32 %v1945, 4294901760
    %2779 = vmatpush1.msra.mxu0 %v2778
    %v2780 = vand.u32 %v1944, 4294901760
    %2781 = vmatprep.subr.mxu0 %v2780
    %v2782 = vand.u32 %v1943, 4294901760
    %2783 = vmatpush1.msra.mxu0 %v2782
    %v2784 = vand.u32 %v1942, 4294901760
    %2785 = vmatprep.subr.mxu0 %v2784
    %v2786 = vand.u32 %v1941, 4294901760
    %2787 = vmatpush1.msra.mxu0 %v2786
    %v2788 = vand.u32 %v1940, 4294901760
    %2789 = vmatprep.subr.mxu0 %v2788
    %v2790 = vand.u32 %v1939, 4294901760
    %2791 = vmatpush1.msra.mxu0 %v2790
    %v2792 = vand.u32 %v1938, 4294901760
    %2793 = vmatprep.subr.mxu0 %v2792
    %v2794 = vand.u32 %v1937, 4294901760
    %2795 = vmatpush1.msra.mxu0 %v2794
    %2796 = vmatprep.subr.mxu0 0.0
    %2797 = vmatpush2.msra.mxu0 0.0
    %2798 = vmatprep.subr.mxu0 0.0
    %2799 = vmatpush2.msra.mxu0 0.0
    %2800 = vmatprep.subr.mxu0 0.0
    %2801 = vmatpush2.msra.mxu0 0.0
    %2802 = vmatprep.subr.mxu0 0.0
    %2803 = vmatpush2.msra.mxu0 0.0
    %2804 = vmatprep.subr.mxu0 0.0
    %2805 = vmatpush2.msra.mxu0 0.0
    %2806 = vmatprep.subr.mxu0 0.0
    %2807 = vmatpush2.msra.mxu0 0.0
    %2808 = vmatprep.subr.mxu0 0.0
    %2809 = vmatpush2.msra.mxu0 0.0
    %2810 = vmatprep.subr.mxu0 0.0
    %2811 = vmatpush2.msra.mxu0 0.0
    %2812 = vmatprep.subr.mxu0 0.0
    %2813 = vmatpush2.msra.mxu0 0.0
    %2814 = vmatprep.subr.mxu0 0.0
    %2815 = vmatpush2.msra.mxu0 0.0
    %2816 = vmatprep.subr.mxu0 0.0
    %2817 = vmatpush2.msra.mxu0 0.0
    %2818 = vmatprep.subr.mxu0 0.0
    %2819 = vmatpush2.msra.mxu0 0.0
    %2820 = vmatprep.subr.mxu0 0.0
    %2821 = vmatpush2.msra.mxu0 0.0
    %2822 = vmatprep.subr.mxu0 0.0
    %2823 = vmatpush2.msra.mxu0 0.0
    %2824 = vmatprep.subr.mxu0 0.0
    %2825 = vmatpush2.msra.mxu0 0.0
    %2826 = vmatprep.subr.mxu0 0.0
    %2827 = vmatpush2.msra.mxu0 0.0
    %2828 = vmatprep.mubr.f32.mxu0 0.0
    %v2829 = vand.u32 %v1936, 4294901760
    %2830 = vmatmul.mubr.f32.gmra.mxu0 %v2829
    %v2831 = vpop.f32.mrf.mxu0
    %v2832 = vadd.f32 %v2728, %v2831
    %v2833 = vpop.f32.mrf.mxu0
    %v2834 = vadd.f32 %v2730, %v2833
    %2835 = vdwg.mxu0
    %2836 = vst [vmem:[#allocation11] sm:$0xff] %v2832
    %2837 = vst [vmem:[#allocation11 + $0x8] sm:$0xff] %v2834
    // Predicated region
    $region58: #{_ae_decoder_call.1} parent=1 // pred_check
      _
    $region59: #{_ae_decoder_call.1} parent=1 // pred_check_branch
      %2839 = sbr.rel (0) target = $region61
    $region60: #{_ae_decoder_call.1} parent=1 // pred_region
      %s2841 = ssub.s32 256, 256
      %2842 = vsyncadd [#allocation4], %s2841
      %s2844 = sshll.u32 [#allocation11], 4
      %s2845 = int_to_ptr.vmem [resolvable:$true] %s2844
      %2847 = dma.vmem_to_hbm [thread:$0]  %s2845, 256, %s9, [#allocation4]
    $region61: #{_ae_decoder_call.1} parent=1 // pred_fallthru
      _
    // Predicated region
    $region62: #{_ae_decoder_call.1} parent=1 // pred_check
      _
    $region63: #{_ae_decoder_call.1} parent=1 // pred_check_branch
      %2849 = sbr.rel (0) target = $region65
    $region64: #{_ae_decoder_call.1} parent=1 // pred_region
      %2850 = dma.done [#allocation4], 256
    $region65: #{_ae_decoder_call.1} parent=1 // pred_fallthru
      _
    %2851 = vsyncpa [#allocation3], 1
    %2852 = vsyncpa [#allocation6], 1
    %2853 = vsyncpa [#allocation9], 1
    %2854 = vsyncpa [#allocation4], 1

</llo_original>
